<compile_context>
chip_gen: v7x
topology: tpu7x:2x2x1
jax: 0.10.0
libtpu: 0.0.40
codegen_flags: <defaults>
</compile_context>

<pallas_src>
import jax
import jax.numpy as jnp
from jax import lax
from jax.experimental import pallas as pl
from jax.experimental.pallas import tpu as pltpu


def make_kernel(H, W, C):
    HW = H * W

    def shift_zero(a, d):
        # result[:, p] = a[:, p + d] if 0 <= p + d < L else 0   (static lane shift, zero fill)
        if d == 0:
            return a
        L = a.shape[1]
        z = jnp.zeros((a.shape[0], abs(d)), a.dtype)
        if d > 0:
            return jnp.concatenate([a[:, d:], z], axis=1)
        return jnp.concatenate([z, a[:, :L + d]], axis=1)

    def kernel(x_ref, w1_ref, s1_ref, b1_ref, w2_ref, s2_ref, b2_ref,
               wt1_ref, bt1_ref, wt2_ref, bt2_ref,
               wf1_ref, bf1_ref, wf2_ref, bf2_ref,
               rt_ref, rf_ref, et_ref, ef_ref, ml_ref, mr_ref,
               out_ref):
        x = x_ref[...]                      # (C, HW)  this image, NCHW-native flattening
        mask_l = ml_ref[...]                # (1, HW): zero on first column of each row
        mask_r = mr_ref[...]                # (1, HW): zero on last column of each row

        def im2col_3x3(a):                  # (C, HW) -> (9C, HW)
            parts = []
            for kh in range(3):
                for kw in range(3):
                    d = (kh - 1) * W + (kw - 1)
                    s = shift_zero(a, d)
                    # kill cross-row contamination of the +/-1 column taps
                    if kw == 0:
                        s = s * mask_l
                    elif kw == 2:
                        s = s * mask_r
                    parts.append(s)
            return jnp.concatenate(parts, axis=0)

        def conv1d_3(a, w_ref, b_ref):      # (C, L) -> (C, L): k=3, pad=1 conv1d as one matmul
            stack = jnp.concatenate([shift_zero(a, k - 1) for k in range(3)], axis=0)  # (3C, L)
            return jnp.dot(w_ref[...], stack,
                           preferred_element_type=jnp.float32) + b_ref[...]

        def sigmoid(v):
            # exp + approx reciprocal both run on the EUP slot
            return pl.reciprocal(1.0 + jnp.exp(-v), approx=True)

        # ---- conv1 (3x3, pad=1) + BN1 (folded) + ReLU : single (C,9C)@(9C,HW) matmul ----
        h1 = jnp.dot(w1_ref[...], im2col_3x3(x), preferred_element_type=jnp.float32)
        h1 = jnp.maximum(h1 * s1_ref[...] + b1_ref[...], 0.0)          # (C, HW)

        # ---- conv2 (3x3, pad=1) + BN2 (folded) ----
        out1 = jnp.dot(w2_ref[...], im2col_3x3(h1), preferred_element_type=jnp.float32)
        out1 = out1 * s2_ref[...] + b2_ref[...]                        # (C, HW)

        # ---- attention pooling: mean over H -> (C, W), mean over W -> (C, H), via matmul ----
        a_t = jnp.dot(h1, rt_ref[...], preferred_element_type=jnp.float32)   # (C, W)
        a_f = jnp.dot(h1, rf_ref[...], preferred_element_type=jnp.float32)   # (C, H)

        a_t = jnp.maximum(conv1d_3(a_t, wt1_ref, bt1_ref), 0.0)
        a_t = sigmoid(conv1d_3(a_t, wt2_ref, bt2_ref))                 # (C, W)
        a_f = jnp.maximum(conv1d_3(a_f, wf1_ref, bf1_ref), 0.0)
        a_f = sigmoid(conv1d_3(a_f, wf2_ref, bf2_ref))                 # (C, H)

        # ---- broadcast back to (C, HW) with 0/1 expansion matmuls, combine, residual, ReLU ----
        a_tf = jnp.dot(a_t, et_ref[...], preferred_element_type=jnp.float32) * \
               jnp.dot(a_f, ef_ref[...], preferred_element_type=jnp.float32)  # (C, HW)

        out_ref[...] = jnp.maximum(a_tf * out1 + x, 0.0).astype(out_ref.dtype)

    return kernel


def custom_basic_block_v3(x_nchw, p):
    """Fused forward pass. x_nchw: (N, C, H, W) float32 -> (N, C, H, W) float32."""
    N, C, H, W = x_nchw.shape
    HW = H * W
    f32 = jnp.float32
    x = x_nchw.reshape(N, C, HW).astype(f32)        # free reshape: NCHW is already (C, HW)-major

    def col(v):                                     # per-channel vector -> (C, 1)
        return v.reshape(C, 1).astype(f32)

    # conv weights pre-reshaped for left-multiplication on the (taps*Cin, HW) im2col stack
    w1m = p['w1'].reshape(9 * C, C).T.astype(f32)    # (C, 9C)   HWIO -> (Cout, kh*kw*Cin)
    w2m = p['w2'].reshape(9 * C, C).T.astype(f32)
    wt1m = p['wt1'].reshape(3 * C, C).T.astype(f32)  # (C, 3C)   (K,Cin,Cout) -> (Cout, K*Cin)
    wt2m = p['wt2'].reshape(3 * C, C).T.astype(f32)
    wf1m = p['wf1'].reshape(3 * C, C).T.astype(f32)
    wf2m = p['wf2'].reshape(3 * C, C).T.astype(f32)

    # constant pooling / expansion matrices and column masks (built once on host side)
    pos = jnp.arange(HW)
    wpos = pos % W
    hpos = pos // W
    rt = (wpos[:, None] == jnp.arange(W)[None, :]).astype(f32) / H   # (HW, W): mean over H
    rf = (hpos[:, None] == jnp.arange(H)[None, :]).astype(f32) / W   # (HW, H): mean over W
    et = (jnp.arange(W)[:, None] == wpos[None, :]).astype(f32)       # (W, HW): tile along H
    ef = (jnp.arange(H)[:, None] == hpos[None, :]).astype(f32)       # (H, HW): repeat along W
    mask_l = (wpos >= 1).astype(f32).reshape(1, HW)
    mask_r = (wpos <= W - 2).astype(f32).reshape(1, HW)

    args = (x,
            w1m, col(p['s1']), col(p['b1']),
            w2m, col(p['s2']), col(p['b2']),
            wt1m, col(p['bt1']), wt2m, col(p['bt2']),
            wf1m, col(p['bf1']), wf2m, col(p['bf2']),
            rt, rf, et, ef, mask_l, mask_r)

    def const_spec(a):
        return pl.BlockSpec(a.shape, lambda n: (0,) * a.ndim)

    in_specs = [pl.BlockSpec((None, C, HW), lambda n: (n, 0, 0))] + \
               [const_spec(a) for a in args[1:]]

    out = pl.pallas_call(
        make_kernel(H, W, C),
        out_shape=jax.ShapeDtypeStruct((N, C, HW), jnp.float32),
        grid=(N,),
        in_specs=in_specs,
        out_specs=pl.BlockSpec((None, C, HW), lambda n: (n, 0, 0)),
        compiler_params=pltpu.CompilerParams(
            dimension_semantics=("parallel",)),
    )(*args)
    return out.reshape(N, C, H, W)


def reference(x_nchw, p):
    """Pure-JAX/XLA reference mirroring the PyTorch forward (eval-mode BN)."""
    x = jnp.transpose(x_nchw, (0, 2, 3, 1))
    dn2 = ('NHWC', 'HWIO', 'NHWC')
    dn1 = ('NWC', 'WIO', 'NWC')
    out = lax.conv_general_dilated(x, p['w1'], (1, 1), 'SAME', dimension_numbers=dn2)
    out = jnp.maximum(out * p['s1'] + p['b1'], 0.0)
    out1 = lax.conv_general_dilated(out, p['w2'], (1, 1), 'SAME', dimension_numbers=dn2)
    out1 = out1 * p['s2'] + p['b2']
    a_t = jnp.mean(out, axis=1)   # mean over H -> (N, W, C)
    a_f = jnp.mean(out, axis=2)   # mean over W -> (N, H, C)
    a_t = jnp.maximum(lax.conv_general_dilated(a_t, p['wt1'], (1,), 'SAME',
                                               dimension_numbers=dn1) + p['bt1'], 0.0)
    a_t = jax.nn.sigmoid(lax.conv_general_dilated(a_t, p['wt2'], (1,), 'SAME',
                                                  dimension_numbers=dn1) + p['bt2'])
    a_f = jnp.maximum(lax.conv_general_dilated(a_f, p['wf1'], (1,), 'SAME',
                                               dimension_numbers=dn1) + p['bf1'], 0.0)
    a_f = jax.nn.sigmoid(lax.conv_general_dilated(a_f, p['wf2'], (1,), 'SAME',
                                                  dimension_numbers=dn1) + p['bf2'])
    a_tf = a_t[:, None, :, :] * a_f[:, :, None, :]
    y = jnp.maximum(a_tf * out1 + x, 0.0)
    return jnp.transpose(y, (0, 3, 1, 2))


def init_params(key, C):
    """Deterministic synthetic parameters (shapes from CustomBasicBlockV3.__init__)."""
    ks = jax.random.split(key, 10)
    eps = 1e-5
    # BatchNorm2d defaults: gamma=1, beta=0, running_mean=0, running_var=1 (eval-mode fold)
    gamma = jnp.ones((C,), jnp.float32)
    beta = jnp.zeros((C,), jnp.float32)
    rmean = jnp.zeros((C,), jnp.float32)
    rvar = jnp.ones((C,), jnp.float32)
    scale = gamma / jnp.sqrt(rvar + eps)
    bias = beta - rmean * scale
    r = lambda k, shp: 0.1 * jax.random.normal(k, shp, jnp.float32)
    return {
        'w1': r(ks[0], (3, 3, C, C)),   # conv1 (HWIO)
        'w2': r(ks[1], (3, 3, C, C)),   # conv2 (HWIO)
        's1': scale, 'b1': bias, 's2': scale, 'b2': bias,
        'wt1': r(ks[2], (3, C, C)), 'bt1': r(ks[3], (C,)),   # t_conv1 (K, Cin, Cout)
        'wt2': r(ks[4], (3, C, C)), 'bt2': r(ks[5], (C,)),   # t_conv2
        'wf1': r(ks[6], (3, C, C)), 'bf1': r(ks[7], (C,)),   # f_conv1
        'wf2': r(ks[8], (3, C, C)), 'bf2': r(ks[9], (C,)),   # f_conv2
    }


if __name__ == "__main__":
    key = jax.random.PRNGKey(0)
    kx, kp = jax.random.split(key)
    N, C, H, W = 2, 8, 16, 16          # inplanes == planes == 8, stride=1, no downsample
    x = jax.random.normal(kx, (N, C, H, W), jnp.float32)
    params = init_params(kp, C)

    y = custom_basic_block_v3(x, params)
    y = jax.block_until_ready(y)

    y_ref = reference(x, params)
    assert y.shape == (N, C, H, W)
    assert bool(jnp.all(jnp.isfinite(y)))
    # loose tolerance: MXU matmul rounding + approx reciprocal differ from XLA's conv path
    max_err = float(jnp.max(jnp.abs(y - y_ref)))
    assert max_err < 5e-2, max_err
    print("KERNEL_OK")
</pallas_src>

<mosaic_0001>
module attributes {stable_mosaic.version = 11 : i64} {
  func.func @kernel(%arg0: i32, %arg1: memref<1x8x256xf32, #tpu.memory_space<vmem>>, %arg2: memref<8x72xf32, #tpu.memory_space<vmem>>, %arg3: memref<8x1xf32, #tpu.memory_space<vmem>>, %arg4: memref<8x1xf32, #tpu.memory_space<vmem>>, %arg5: memref<8x72xf32, #tpu.memory_space<vmem>>, %arg6: memref<8x1xf32, #tpu.memory_space<vmem>>, %arg7: memref<8x1xf32, #tpu.memory_space<vmem>>, %arg8: memref<8x24xf32, #tpu.memory_space<vmem>>, %arg9: memref<8x1xf32, #tpu.memory_space<vmem>>, %arg10: memref<8x24xf32, #tpu.memory_space<vmem>>, %arg11: memref<8x1xf32, #tpu.memory_space<vmem>>, %arg12: memref<8x24xf32, #tpu.memory_space<vmem>>, %arg13: memref<8x1xf32, #tpu.memory_space<vmem>>, %arg14: memref<8x24xf32, #tpu.memory_space<vmem>>, %arg15: memref<8x1xf32, #tpu.memory_space<vmem>>, %arg16: memref<256x16xf32, #tpu.memory_space<vmem>>, %arg17: memref<256x16xf32, #tpu.memory_space<vmem>>, %arg18: memref<16x256xf32, #tpu.memory_space<vmem>>, %arg19: memref<16x256xf32, #tpu.memory_space<vmem>>, %arg20: memref<1x256xf32, #tpu.memory_space<vmem>>, %arg21: memref<1x256xf32, #tpu.memory_space<vmem>>, %arg22: memref<1x8x256xf32, #tpu.memory_space<vmem>>) attributes {dimension_semantics = [#tpu.dimension_semantics<parallel>], iteration_bounds = array<i64: 2>, scalar_prefetch = 0 : i64, scratch_operands = 0 : i64, tpu.core_type = #tpu.core_type<tc>, window_params = [{transform_indices = @transform_0, window_bounds = array<i64: 1, 8, 256>}, {pipeline_mode = #tpu.pipeline_mode<synchronous>, transform_indices = @transform_1, window_bounds = array<i64: 8, 72>}, {pipeline_mode = #tpu.pipeline_mode<synchronous>, transform_indices = @transform_2, window_bounds = array<i64: 8, 1>}, {pipeline_mode = #tpu.pipeline_mode<synchronous>, transform_indices = @transform_3, window_bounds = array<i64: 8, 1>}, {pipeline_mode = #tpu.pipeline_mode<synchronous>, transform_indices = @transform_4, window_bounds = array<i64: 8, 72>}, {pipeline_mode = #tpu.pipeline_mode<synchronous>, transform_indices = @transform_5, window_bounds = array<i64: 8, 1>}, {pipeline_mode = #tpu.pipeline_mode<synchronous>, transform_indices = @transform_6, window_bounds = array<i64: 8, 1>}, {pipeline_mode = #tpu.pipeline_mode<synchronous>, transform_indices = @transform_7, window_bounds = array<i64: 8, 24>}, {pipeline_mode = #tpu.pipeline_mode<synchronous>, transform_indices = @transform_8, window_bounds = array<i64: 8, 1>}, {pipeline_mode = #tpu.pipeline_mode<synchronous>, transform_indices = @transform_9, window_bounds = array<i64: 8, 24>}, {pipeline_mode = #tpu.pipeline_mode<synchronous>, transform_indices = @transform_10, window_bounds = array<i64: 8, 1>}, {pipeline_mode = #tpu.pipeline_mode<synchronous>, transform_indices = @transform_11, window_bounds = array<i64: 8, 24>}, {pipeline_mode = #tpu.pipeline_mode<synchronous>, transform_indices = @transform_12, window_bounds = array<i64: 8, 1>}, {pipeline_mode = #tpu.pipeline_mode<synchronous>, transform_indices = @transform_13, window_bounds = array<i64: 8, 24>}, {pipeline_mode = #tpu.pipeline_mode<synchronous>, transform_indices = @transform_14, window_bounds = array<i64: 8, 1>}, {pipeline_mode = #tpu.pipeline_mode<synchronous>, transform_indices = @transform_15, window_bounds = array<i64: 256, 16>}, {pipeline_mode = #tpu.pipeline_mode<synchronous>, transform_indices = @transform_16, window_bounds = array<i64: 256, 16>}, {pipeline_mode = #tpu.pipeline_mode<synchronous>, transform_indices = @transform_17, window_bounds = array<i64: 16, 256>}, {pipeline_mode = #tpu.pipeline_mode<synchronous>, transform_indices = @transform_18, window_bounds = array<i64: 16, 256>}, {pipeline_mode = #tpu.pipeline_mode<synchronous>, transform_indices = @transform_19, window_bounds = array<i64: 1, 256>}, {pipeline_mode = #tpu.pipeline_mode<synchronous>, transform_indices = @transform_20, window_bounds = array<i64: 1, 256>}, {transform_indices = @transform_21, window_bounds = array<i64: 1, 8, 256>}]} {
    %c0 = arith.constant 0 : index
    %c0_0 = arith.constant 0 : index
    %c0_1 = arith.constant 0 : index
    %0 = vector.load %arg1[%c0, %c0_0, %c0_1] : memref<1x8x256xf32, #tpu.memory_space<vmem>>, vector<1x8x256xf32>
    %1 = vector.shape_cast %0 : vector<1x8x256xf32> to vector<8x256xf32>
    %c0_2 = arith.constant 0 : index
    %c0_3 = arith.constant 0 : index
    %2 = vector.load %arg20[%c0_2, %c0_3] : memref<1x256xf32, #tpu.memory_space<vmem>>, vector<1x256xf32>
    %c0_4 = arith.constant 0 : index
    %c0_5 = arith.constant 0 : index
    %3 = vector.load %arg21[%c0_4, %c0_5] : memref<1x256xf32, #tpu.memory_space<vmem>>, vector<1x256xf32>
    %c0_6 = arith.constant 0 : index
    %c0_7 = arith.constant 0 : index
    %4 = vector.load %arg2[%c0_6, %c0_7] : memref<8x72xf32, #tpu.memory_space<vmem>>, vector<8x72xf32>
    %cst = arith.constant 0.000000e+00 : f32
    %5 = vector.broadcast %cst : f32 to vector<8x17xf32>
    %6 = vector.extract_strided_slice %1 {offsets = [0, 0], sizes = [8, 239], strides = [1, 1]} : vector<8x256xf32> to vector<8x239xf32>
    %7 = tpu.concatenate %5, %6 in 1 : vector<8x17xf32>, vector<8x239xf32> -> vector<8x256xf32>
    %8 = vector.broadcast %2 : vector<1x256xf32> to vector<8x256xf32>
    %9 = arith.mulf %7, %8 : vector<8x256xf32>
    %cst_8 = arith.constant 0.000000e+00 : f32
    %10 = vector.broadcast %cst_8 : f32 to vector<8x16xf32>
    %11 = vector.extract_strided_slice %1 {offsets = [0, 0], sizes = [8, 240], strides = [1, 1]} : vector<8x256xf32> to vector<8x240xf32>
    %12 = tpu.concatenate %10, %11 in 1 : vector<8x16xf32>, vector<8x240xf32> -> vector<8x256xf32>
    %cst_9 = arith.constant 0.000000e+00 : f32
    %13 = vector.broadcast %cst_9 : f32 to vector<8x15xf32>
    %14 = vector.extract_strided_slice %1 {offsets = [0, 0], sizes = [8, 241], strides = [1, 1]} : vector<8x256xf32> to vector<8x241xf32>
    %15 = tpu.concatenate %13, %14 in 1 : vector<8x15xf32>, vector<8x241xf32> -> vector<8x256xf32>
    %16 = vector.broadcast %3 : vector<1x256xf32> to vector<8x256xf32>
    %17 = arith.mulf %15, %16 : vector<8x256xf32>
    %cst_10 = arith.constant 0.000000e+00 : f32
    %18 = vector.broadcast %cst_10 : f32 to vector<8x1xf32>
    %19 = vector.extract_strided_slice %1 {offsets = [0, 0], sizes = [8, 255], strides = [1, 1]} : vector<8x256xf32> to vector<8x255xf32>
    %20 = tpu.concatenate %18, %19 in 1 : vector<8x1xf32>, vector<8x255xf32> -> vector<8x256xf32>
    %21 = vector.broadcast %2 : vector<1x256xf32> to vector<8x256xf32>
    %22 = arith.mulf %20, %21 : vector<8x256xf32>
    %cst_11 = arith.constant 0.000000e+00 : f32
    %23 = vector.broadcast %cst_11 : f32 to vector<8x1xf32>
    %24 = vector.extract_strided_slice %1 {offsets = [0, 1], sizes = [8, 255], strides = [1, 1]} : vector<8x256xf32> to vector<8x255xf32>
    %25 = tpu.concatenate %24, %23 in 1 : vector<8x255xf32>, vector<8x1xf32> -> vector<8x256xf32>
    %26 = vector.broadcast %3 : vector<1x256xf32> to vector<8x256xf32>
    %27 = arith.mulf %25, %26 : vector<8x256xf32>
    %cst_12 = arith.constant 0.000000e+00 : f32
    %28 = vector.broadcast %cst_12 : f32 to vector<8x15xf32>
    %29 = vector.extract_strided_slice %1 {offsets = [0, 15], sizes = [8, 241], strides = [1, 1]} : vector<8x256xf32> to vector<8x241xf32>
    %30 = tpu.concatenate %29, %28 in 1 : vector<8x241xf32>, vector<8x15xf32> -> vector<8x256xf32>
    %31 = vector.broadcast %2 : vector<1x256xf32> to vector<8x256xf32>
    %32 = arith.mulf %30, %31 : vector<8x256xf32>
    %cst_13 = arith.constant 0.000000e+00 : f32
    %33 = vector.broadcast %cst_13 : f32 to vector<8x16xf32>
    %34 = vector.extract_strided_slice %1 {offsets = [0, 16], sizes = [8, 240], strides = [1, 1]} : vector<8x256xf32> to vector<8x240xf32>
    %35 = tpu.concatenate %34, %33 in 1 : vector<8x240xf32>, vector<8x16xf32> -> vector<8x256xf32>
    %cst_14 = arith.constant 0.000000e+00 : f32
    %36 = vector.broadcast %cst_14 : f32 to vector<8x17xf32>
    %37 = vector.extract_strided_slice %1 {offsets = [0, 17], sizes = [8, 239], strides = [1, 1]} : vector<8x256xf32> to vector<8x239xf32>
    %38 = tpu.concatenate %37, %36 in 1 : vector<8x239xf32>, vector<8x17xf32> -> vector<8x256xf32>
    %39 = vector.broadcast %3 : vector<1x256xf32> to vector<8x256xf32>
    %40 = arith.mulf %38, %39 : vector<8x256xf32>
    %41 = tpu.concatenate %9, %12, %17, %22, %1, %27, %32, %35, %40 in 0 : vector<8x256xf32>, vector<8x256xf32>, vector<8x256xf32>, vector<8x256xf32>, vector<8x256xf32>, vector<8x256xf32>, vector<8x256xf32>, vector<8x256xf32>, vector<8x256xf32> -> vector<72x256xf32>
    %cst_15 = arith.constant dense<0.000000e+00> : vector<8x256xf32>
    %42 = tpu.matmul %4, %41, %cst_15 {dimension_numbers = #tpu.dot_dimension_numbers<[1], [0], [0], [1], [0, 0, 1, 1], [], []>} : vector<8x72xf32>, vector<72x256xf32>, vector<8x256xf32> -> vector<8x256xf32>
    %c0_16 = arith.constant 0 : index
    %c0_17 = arith.constant 0 : index
    %43 = vector.load %arg3[%c0_16, %c0_17] : memref<8x1xf32, #tpu.memory_space<vmem>>, vector<8x1xf32>
    %44 = vector.broadcast %43 : vector<8x1xf32> to vector<8x256xf32>
    %45 = arith.mulf %42, %44 : vector<8x256xf32>
    %c0_18 = arith.constant 0 : index
    %c0_19 = arith.constant 0 : index
    %46 = vector.load %arg4[%c0_18, %c0_19] : memref<8x1xf32, #tpu.memory_space<vmem>>, vector<8x1xf32>
    %47 = vector.broadcast %46 : vector<8x1xf32> to vector<8x256xf32>
    %48 = arith.addf %45, %47 : vector<8x256xf32>
    %cst_20 = arith.constant 0.000000e+00 : f32
    %49 = vector.broadcast %cst_20 : f32 to vector<8x256xf32>
    %50 = arith.maximumf %48, %49 : vector<8x256xf32>
    %c0_21 = arith.constant 0 : index
    %c0_22 = arith.constant 0 : index
    %51 = vector.load %arg5[%c0_21, %c0_22] : memref<8x72xf32, #tpu.memory_space<vmem>>, vector<8x72xf32>
    %cst_23 = arith.constant 0.000000e+00 : f32
    %52 = vector.broadcast %cst_23 : f32 to vector<8x17xf32>
    %53 = vector.extract_strided_slice %50 {offsets = [0, 0], sizes = [8, 239], strides = [1, 1]} : vector<8x256xf32> to vector<8x239xf32>
    %54 = tpu.concatenate %52, %53 in 1 : vector<8x17xf32>, vector<8x239xf32> -> vector<8x256xf32>
    %55 = vector.broadcast %2 : vector<1x256xf32> to vector<8x256xf32>
    %56 = arith.mulf %54, %55 : vector<8x256xf32>
    %cst_24 = arith.constant 0.000000e+00 : f32
    %57 = vector.broadcast %cst_24 : f32 to vector<8x16xf32>
    %58 = vector.extract_strided_slice %50 {offsets = [0, 0], sizes = [8, 240], strides = [1, 1]} : vector<8x256xf32> to vector<8x240xf32>
    %59 = tpu.concatenate %57, %58 in 1 : vector<8x16xf32>, vector<8x240xf32> -> vector<8x256xf32>
    %cst_25 = arith.constant 0.000000e+00 : f32
    %60 = vector.broadcast %cst_25 : f32 to vector<8x15xf32>
    %61 = vector.extract_strided_slice %50 {offsets = [0, 0], sizes = [8, 241], strides = [1, 1]} : vector<8x256xf32> to vector<8x241xf32>
    %62 = tpu.concatenate %60, %61 in 1 : vector<8x15xf32>, vector<8x241xf32> -> vector<8x256xf32>
    %63 = vector.broadcast %3 : vector<1x256xf32> to vector<8x256xf32>
    %64 = arith.mulf %62, %63 : vector<8x256xf32>
    %cst_26 = arith.constant 0.000000e+00 : f32
    %65 = vector.broadcast %cst_26 : f32 to vector<8x1xf32>
    %66 = vector.extract_strided_slice %50 {offsets = [0, 0], sizes = [8, 255], strides = [1, 1]} : vector<8x256xf32> to vector<8x255xf32>
    %67 = tpu.concatenate %65, %66 in 1 : vector<8x1xf32>, vector<8x255xf32> -> vector<8x256xf32>
    %68 = vector.broadcast %2 : vector<1x256xf32> to vector<8x256xf32>
    %69 = arith.mulf %67, %68 : vector<8x256xf32>
    %cst_27 = arith.constant 0.000000e+00 : f32
    %70 = vector.broadcast %cst_27 : f32 to vector<8x1xf32>
    %71 = vector.extract_strided_slice %50 {offsets = [0, 1], sizes = [8, 255], strides = [1, 1]} : vector<8x256xf32> to vector<8x255xf32>
    %72 = tpu.concatenate %71, %70 in 1 : vector<8x255xf32>, vector<8x1xf32> -> vector<8x256xf32>
    %73 = vector.broadcast %3 : vector<1x256xf32> to vector<8x256xf32>
    %74 = arith.mulf %72, %73 : vector<8x256xf32>
    %cst_28 = arith.constant 0.000000e+00 : f32
    %75 = vector.broadcast %cst_28 : f32 to vector<8x15xf32>
    %76 = vector.extract_strided_slice %50 {offsets = [0, 15], sizes = [8, 241], strides = [1, 1]} : vector<8x256xf32> to vector<8x241xf32>
    %77 = tpu.concatenate %76, %75 in 1 : vector<8x241xf32>, vector<8x15xf32> -> vector<8x256xf32>
    %78 = vector.broadcast %2 : vector<1x256xf32> to vector<8x256xf32>
    %79 = arith.mulf %77, %78 : vector<8x256xf32>
    %cst_29 = arith.constant 0.000000e+00 : f32
    %80 = vector.broadcast %cst_29 : f32 to vector<8x16xf32>
    %81 = vector.extract_strided_slice %50 {offsets = [0, 16], sizes = [8, 240], strides = [1, 1]} : vector<8x256xf32> to vector<8x240xf32>
    %82 = tpu.concatenate %81, %80 in 1 : vector<8x240xf32>, vector<8x16xf32> -> vector<8x256xf32>
    %cst_30 = arith.constant 0.000000e+00 : f32
    %83 = vector.broadcast %cst_30 : f32 to vector<8x17xf32>
    %84 = vector.extract_strided_slice %50 {offsets = [0, 17], sizes = [8, 239], strides = [1, 1]} : vector<8x256xf32> to vector<8x239xf32>
    %85 = tpu.concatenate %84, %83 in 1 : vector<8x239xf32>, vector<8x17xf32> -> vector<8x256xf32>
    %86 = vector.broadcast %3 : vector<1x256xf32> to vector<8x256xf32>
    %87 = arith.mulf %85, %86 : vector<8x256xf32>
    %88 = tpu.concatenate %56, %59, %64, %69, %50, %74, %79, %82, %87 in 0 : vector<8x256xf32>, vector<8x256xf32>, vector<8x256xf32>, vector<8x256xf32>, vector<8x256xf32>, vector<8x256xf32>, vector<8x256xf32>, vector<8x256xf32>, vector<8x256xf32> -> vector<72x256xf32>
    %cst_31 = arith.constant dense<0.000000e+00> : vector<8x256xf32>
    %89 = tpu.matmul %51, %88, %cst_31 {dimension_numbers = #tpu.dot_dimension_numbers<[1], [0], [0], [1], [0, 0, 1, 1], [], []>} : vector<8x72xf32>, vector<72x256xf32>, vector<8x256xf32> -> vector<8x256xf32>
    %c0_32 = arith.constant 0 : index
    %c0_33 = arith.constant 0 : index
    %90 = vector.load %arg6[%c0_32, %c0_33] : memref<8x1xf32, #tpu.memory_space<vmem>>, vector<8x1xf32>
    %91 = vector.broadcast %90 : vector<8x1xf32> to vector<8x256xf32>
    %92 = arith.mulf %89, %91 : vector<8x256xf32>
    %c0_34 = arith.constant 0 : index
    %c0_35 = arith.constant 0 : index
    %93 = vector.load %arg7[%c0_34, %c0_35] : memref<8x1xf32, #tpu.memory_space<vmem>>, vector<8x1xf32>
    %94 = vector.broadcast %93 : vector<8x1xf32> to vector<8x256xf32>
    %95 = arith.addf %92, %94 : vector<8x256xf32>
    %c0_36 = arith.constant 0 : index
    %c0_37 = arith.constant 0 : index
    %96 = vector.load %arg16[%c0_36, %c0_37] : memref<256x16xf32, #tpu.memory_space<vmem>>, vector<256x16xf32>
    %cst_38 = arith.constant dense<0.000000e+00> : vector<8x16xf32>
    %97 = tpu.matmul %50, %96, %cst_38 {dimension_numbers = #tpu.dot_dimension_numbers<[1], [0], [0], [1], [0, 0, 1, 1], [], []>} : vector<8x256xf32>, vector<256x16xf32>, vector<8x16xf32> -> vector<8x16xf32>
    %c0_39 = arith.constant 0 : index
    %c0_40 = arith.constant 0 : index
    %98 = vector.load %arg17[%c0_39, %c0_40] : memref<256x16xf32, #tpu.memory_space<vmem>>, vector<256x16xf32>
    %cst_41 = arith.constant dense<0.000000e+00> : vector<8x16xf32>
    %99 = tpu.matmul %50, %98, %cst_41 {dimension_numbers = #tpu.dot_dimension_numbers<[1], [0], [0], [1], [0, 0, 1, 1], [], []>} : vector<8x256xf32>, vector<256x16xf32>, vector<8x16xf32> -> vector<8x16xf32>
    %cst_42 = arith.constant 0.000000e+00 : f32
    %100 = vector.broadcast %cst_42 : f32 to vector<8x1xf32>
    %101 = vector.extract_strided_slice %97 {offsets = [0, 0], sizes = [8, 15], strides = [1, 1]} : vector<8x16xf32> to vector<8x15xf32>
    %102 = tpu.concatenate %100, %101 in 1 : vector<8x1xf32>, vector<8x15xf32> -> vector<8x16xf32>
    %cst_43 = arith.constant 0.000000e+00 : f32
    %103 = vector.broadcast %cst_43 : f32 to vector<8x1xf32>
    %104 = vector.extract_strided_slice %97 {offsets = [0, 1], sizes = [8, 15], strides = [1, 1]} : vector<8x16xf32> to vector<8x15xf32>
    %105 = tpu.concatenate %104, %103 in 1 : vector<8x15xf32>, vector<8x1xf32> -> vector<8x16xf32>
    %106 = tpu.concatenate %102, %97, %105 in 0 : vector<8x16xf32>, vector<8x16xf32>, vector<8x16xf32> -> vector<24x16xf32>
    %c0_44 = arith.constant 0 : index
    %c0_45 = arith.constant 0 : index
    %107 = vector.load %arg8[%c0_44, %c0_45] : memref<8x24xf32, #tpu.memory_space<vmem>>, vector<8x24xf32>
    %cst_46 = arith.constant dense<0.000000e+00> : vector<8x16xf32>
    %108 = tpu.matmul %107, %106, %cst_46 {dimension_numbers = #tpu.dot_dimension_numbers<[1], [0], [0], [1], [0, 0, 1, 1], [], []>} : vector<8x24xf32>, vector<24x16xf32>, vector<8x16xf32> -> vector<8x16xf32>
    %c0_47 = arith.constant 0 : index
    %c0_48 = arith.constant 0 : index
    %109 = vector.load %arg9[%c0_47, %c0_48] : memref<8x1xf32, #tpu.memory_space<vmem>>, vector<8x1xf32>
    %110 = vector.broadcast %109 : vector<8x1xf32> to vector<8x16xf32>
    %111 = arith.addf %108, %110 : vector<8x16xf32>
    %cst_49 = arith.constant 0.000000e+00 : f32
    %112 = vector.broadcast %cst_49 : f32 to vector<8x16xf32>
    %113 = arith.maximumf %111, %112 : vector<8x16xf32>
    %cst_50 = arith.constant 0.000000e+00 : f32
    %114 = vector.broadcast %cst_50 : f32 to vector<8x1xf32>
    %115 = vector.extract_strided_slice %113 {offsets = [0, 0], sizes = [8, 15], strides = [1, 1]} : vector<8x16xf32> to vector<8x15xf32>
    %116 = tpu.concatenate %114, %115 in 1 : vector<8x1xf32>, vector<8x15xf32> -> vector<8x16xf32>
    %cst_51 = arith.constant 0.000000e+00 : f32
    %117 = vector.broadcast %cst_51 : f32 to vector<8x1xf32>
    %118 = vector.extract_strided_slice %113 {offsets = [0, 1], sizes = [8, 15], strides = [1, 1]} : vector<8x16xf32> to vector<8x15xf32>
    %119 = tpu.concatenate %118, %117 in 1 : vector<8x15xf32>, vector<8x1xf32> -> vector<8x16xf32>
    %120 = tpu.concatenate %116, %113, %119 in 0 : vector<8x16xf32>, vector<8x16xf32>, vector<8x16xf32> -> vector<24x16xf32>
    %c0_52 = arith.constant 0 : index
    %c0_53 = arith.constant 0 : index
    %121 = vector.load %arg10[%c0_52, %c0_53] : memref<8x24xf32, #tpu.memory_space<vmem>>, vector<8x24xf32>
    %cst_54 = arith.constant dense<0.000000e+00> : vector<8x16xf32>
    %122 = tpu.matmul %121, %120, %cst_54 {dimension_numbers = #tpu.dot_dimension_numbers<[1], [0], [0], [1], [0, 0, 1, 1], [], []>} : vector<8x24xf32>, vector<24x16xf32>, vector<8x16xf32> -> vector<8x16xf32>
    %c0_55 = arith.constant 0 : index
    %c0_56 = arith.constant 0 : index
    %123 = vector.load %arg11[%c0_55, %c0_56] : memref<8x1xf32, #tpu.memory_space<vmem>>, vector<8x1xf32>
    %124 = vector.broadcast %123 : vector<8x1xf32> to vector<8x16xf32>
    %125 = arith.addf %122, %124 : vector<8x16xf32>
    %cst_57 = arith.constant 0.000000e+00 : f32
    %126 = vector.broadcast %cst_57 : f32 to vector<8x16xf32>
    %127 = arith.subf %126, %125 : vector<8x16xf32>
    %128 = math.exp %127 : vector<8x16xf32>
    %cst_58 = arith.constant 1.000000e+00 : f32
    %129 = vector.broadcast %cst_58 : f32 to vector<8x16xf32>
    %130 = arith.addf %129, %128 : vector<8x16xf32>
    %131 = tpu.reciprocal %130 {approx = true} : vector<8x16xf32> -> vector<8x16xf32>
    %cst_59 = arith.constant 0.000000e+00 : f32
    %132 = vector.broadcast %cst_59 : f32 to vector<8x1xf32>
    %133 = vector.extract_strided_slice %99 {offsets = [0, 0], sizes = [8, 15], strides = [1, 1]} : vector<8x16xf32> to vector<8x15xf32>
    %134 = tpu.concatenate %132, %133 in 1 : vector<8x1xf32>, vector<8x15xf32> -> vector<8x16xf32>
    %cst_60 = arith.constant 0.000000e+00 : f32
    %135 = vector.broadcast %cst_60 : f32 to vector<8x1xf32>
    %136 = vector.extract_strided_slice %99 {offsets = [0, 1], sizes = [8, 15], strides = [1, 1]} : vector<8x16xf32> to vector<8x15xf32>
    %137 = tpu.concatenate %136, %135 in 1 : vector<8x15xf32>, vector<8x1xf32> -> vector<8x16xf32>
    %138 = tpu.concatenate %134, %99, %137 in 0 : vector<8x16xf32>, vector<8x16xf32>, vector<8x16xf32> -> vector<24x16xf32>
    %c0_61 = arith.constant 0 : index
    %c0_62 = arith.constant 0 : index
    %139 = vector.load %arg12[%c0_61, %c0_62] : memref<8x24xf32, #tpu.memory_space<vmem>>, vector<8x24xf32>
    %cst_63 = arith.constant dense<0.000000e+00> : vector<8x16xf32>
    %140 = tpu.matmul %139, %138, %cst_63 {dimension_numbers = #tpu.dot_dimension_numbers<[1], [0], [0], [1], [0, 0, 1, 1], [], []>} : vector<8x24xf32>, vector<24x16xf32>, vector<8x16xf32> -> vector<8x16xf32>
    %c0_64 = arith.constant 0 : index
    %c0_65 = arith.constant 0 : index
    %141 = vector.load %arg13[%c0_64, %c0_65] : memref<8x1xf32, #tpu.memory_space<vmem>>, vector<8x1xf32>
    %142 = vector.broadcast %141 : vector<8x1xf32> to vector<8x16xf32>
    %143 = arith.addf %140, %142 : vector<8x16xf32>
    %cst_66 = arith.constant 0.000000e+00 : f32
    %144 = vector.broadcast %cst_66 : f32 to vector<8x16xf32>
    %145 = arith.maximumf %143, %144 : vector<8x16xf32>
    %cst_67 = arith.constant 0.000000e+00 : f32
    %146 = vector.broadcast %cst_67 : f32 to vector<8x1xf32>
    %147 = vector.extract_strided_slice %145 {offsets = [0, 0], sizes = [8, 15], strides = [1, 1]} : vector<8x16xf32> to vector<8x15xf32>
    %148 = tpu.concatenate %146, %147 in 1 : vector<8x1xf32>, vector<8x15xf32> -> vector<8x16xf32>
    %cst_68 = arith.constant 0.000000e+00 : f32
    %149 = vector.broadcast %cst_68 : f32 to vector<8x1xf32>
    %150 = vector.extract_strided_slice %145 {offsets = [0, 1], sizes = [8, 15], strides = [1, 1]} : vector<8x16xf32> to vector<8x15xf32>
    %151 = tpu.concatenate %150, %149 in 1 : vector<8x15xf32>, vector<8x1xf32> -> vector<8x16xf32>
    %152 = tpu.concatenate %148, %145, %151 in 0 : vector<8x16xf32>, vector<8x16xf32>, vector<8x16xf32> -> vector<24x16xf32>
    %c0_69 = arith.constant 0 : index
    %c0_70 = arith.constant 0 : index
    %153 = vector.load %arg14[%c0_69, %c0_70] : memref<8x24xf32, #tpu.memory_space<vmem>>, vector<8x24xf32>
    %cst_71 = arith.constant dense<0.000000e+00> : vector<8x16xf32>
    %154 = tpu.matmul %153, %152, %cst_71 {dimension_numbers = #tpu.dot_dimension_numbers<[1], [0], [0], [1], [0, 0, 1, 1], [], []>} : vector<8x24xf32>, vector<24x16xf32>, vector<8x16xf32> -> vector<8x16xf32>
    %c0_72 = arith.constant 0 : index
    %c0_73 = arith.constant 0 : index
    %155 = vector.load %arg15[%c0_72, %c0_73] : memref<8x1xf32, #tpu.memory_space<vmem>>, vector<8x1xf32>
    %156 = vector.broadcast %155 : vector<8x1xf32> to vector<8x16xf32>
    %157 = arith.addf %154, %156 : vector<8x16xf32>
    %cst_74 = arith.constant 0.000000e+00 : f32
    %158 = vector.broadcast %cst_74 : f32 to vector<8x16xf32>
    %159 = arith.subf %158, %157 : vector<8x16xf32>
    %160 = math.exp %159 : vector<8x16xf32>
    %cst_75 = arith.constant 1.000000e+00 : f32
    %161 = vector.broadcast %cst_75 : f32 to vector<8x16xf32>
    %162 = arith.addf %161, %160 : vector<8x16xf32>
    %163 = tpu.reciprocal %162 {approx = true} : vector<8x16xf32> -> vector<8x16xf32>
    %c0_76 = arith.constant 0 : index
    %c0_77 = arith.constant 0 : index
    %164 = vector.load %arg18[%c0_76, %c0_77] : memref<16x256xf32, #tpu.memory_space<vmem>>, vector<16x256xf32>
    %cst_78 = arith.constant dense<0.000000e+00> : vector<8x256xf32>
    %165 = tpu.matmul %131, %164, %cst_78 {dimension_numbers = #tpu.dot_dimension_numbers<[1], [0], [0], [1], [0, 0, 1, 1], [], []>} : vector<8x16xf32>, vector<16x256xf32>, vector<8x256xf32> -> vector<8x256xf32>
    %c0_79 = arith.constant 0 : index
    %c0_80 = arith.constant 0 : index
    %166 = vector.load %arg19[%c0_79, %c0_80] : memref<16x256xf32, #tpu.memory_space<vmem>>, vector<16x256xf32>
    %cst_81 = arith.constant dense<0.000000e+00> : vector<8x256xf32>
    %167 = tpu.matmul %163, %166, %cst_81 {dimension_numbers = #tpu.dot_dimension_numbers<[1], [0], [0], [1], [0, 0, 1, 1], [], []>} : vector<8x16xf32>, vector<16x256xf32>, vector<8x256xf32> -> vector<8x256xf32>
    %168 = arith.mulf %165, %167 : vector<8x256xf32>
    %169 = arith.mulf %168, %95 : vector<8x256xf32>
    %170 = arith.addf %169, %1 : vector<8x256xf32>
    %cst_82 = arith.constant 0.000000e+00 : f32
    %171 = vector.broadcast %cst_82 : f32 to vector<8x256xf32>
    %172 = arith.maximumf %170, %171 : vector<8x256xf32>
    %c0_83 = arith.constant 0 : index
    %c0_84 = arith.constant 0 : index
    %c0_85 = arith.constant 0 : index
    %173 = vector.load %arg22[%c0_83, %c0_84, %c0_85] : memref<1x8x256xf32, #tpu.memory_space<vmem>>, vector<1x8x256xf32>
    %174 = vector.shape_cast %173 : vector<1x8x256xf32> to vector<8x256xf32>
    %175 = vector.shape_cast %172 : vector<8x256xf32> to vector<1x8x256xf32>
    tpu.vector_store %arg22[%c0_83, %c0_84, %c0_85], %175 {strides = array<i32>} : memref<1x8x256xf32, #tpu.memory_space<vmem>>, vector<1x8x256xf32>,
    return
  }
  func.func @transform_0(%arg0: i32) -> (i32, i32, i32) {
    %c0_i32 = arith.constant 0 : i32
    %c0_i32_0 = arith.constant 0 : i32
    %c0_i32_1 = arith.constant 0 : i32
    return %arg0, %c0_i32, %c0_i32_0 : i32, i32, i32
  }
  func.func @transform_1(%arg0: i32) -> (i32, i32) {
    %c0_i32 = arith.constant 0 : i32
    %c0_i32_0 = arith.constant 0 : i32
    %c0_i32_1 = arith.constant 0 : i32
    return %c0_i32, %c0_i32_0 : i32, i32
  }
  func.func @transform_2(%arg0: i32) -> (i32, i32) {
    %c0_i32 = arith.constant 0 : i32
    %c0_i32_0 = arith.constant 0 : i32
    %c0_i32_1 = arith.constant 0 : i32
    return %c0_i32, %c0_i32_0 : i32, i32
  }
  func.func @transform_3(%arg0: i32) -> (i32, i32) {
    %c0_i32 = arith.constant 0 : i32
    %c0_i32_0 = arith.constant 0 : i32
    %c0_i32_1 = arith.constant 0 : i32
    return %c0_i32, %c0_i32_0 : i32, i32
  }
  func.func @transform_4(%arg0: i32) -> (i32, i32) {
    %c0_i32 = arith.constant 0 : i32
    %c0_i32_0 = arith.constant 0 : i32
    %c0_i32_1 = arith.constant 0 : i32
    return %c0_i32, %c0_i32_0 : i32, i32
  }
  func.func @transform_5(%arg0: i32) -> (i32, i32) {
    %c0_i32 = arith.constant 0 : i32
    %c0_i32_0 = arith.constant 0 : i32
    %c0_i32_1 = arith.constant 0 : i32
    return %c0_i32, %c0_i32_0 : i32, i32
  }
  func.func @transform_6(%arg0: i32) -> (i32, i32) {
    %c0_i32 = arith.constant 0 : i32
    %c0_i32_0 = arith.constant 0 : i32
    %c0_i32_1 = arith.constant 0 : i32
    return %c0_i32, %c0_i32_0 : i32, i32
  }
  func.func @transform_7(%arg0: i32) -> (i32, i32) {
    %c0_i32 = arith.constant 0 : i32
    %c0_i32_0 = arith.constant 0 : i32
    %c0_i32_1 = arith.constant 0 : i32
    return %c0_i32, %c0_i32_0 : i32, i32
  }
  func.func @transform_8(%arg0: i32) -> (i32, i32) {
    %c0_i32 = arith.constant 0 : i32
    %c0_i32_0 = arith.constant 0 : i32
    %c0_i32_1 = arith.constant 0 : i32
    return %c0_i32, %c0_i32_0 : i32, i32
  }
  func.func @transform_9(%arg0: i32) -> (i32, i32) {
    %c0_i32 = arith.constant 0 : i32
    %c0_i32_0 = arith.constant 0 : i32
    %c0_i32_1 = arith.constant 0 : i32
    return %c0_i32, %c0_i32_0 : i32, i32
  }
  func.func @transform_10(%arg0: i32) -> (i32, i32) {
    %c0_i32 = arith.constant 0 : i32
    %c0_i32_0 = arith.constant 0 : i32
    %c0_i32_1 = arith.constant 0 : i32
    return %c0_i32, %c0_i32_0 : i32, i32
  }
  func.func @transform_11(%arg0: i32) -> (i32, i32) {
    %c0_i32 = arith.constant 0 : i32
    %c0_i32_0 = arith.constant 0 : i32
    %c0_i32_1 = arith.constant 0 : i32
    return %c0_i32, %c0_i32_0 : i32, i32
  }
  func.func @transform_12(%arg0: i32) -> (i32, i32) {
    %c0_i32 = arith.constant 0 : i32
    %c0_i32_0 = arith.constant 0 : i32
    %c0_i32_1 = arith.constant 0 : i32
    return %c0_i32, %c0_i32_0 : i32, i32
  }
  func.func @transform_13(%arg0: i32) -> (i32, i32) {
    %c0_i32 = arith.constant 0 : i32
    %c0_i32_0 = arith.constant 0 : i32
    %c0_i32_1 = arith.constant 0 : i32
    return %c0_i32, %c0_i32_0 : i32, i32
  }
  func.func @transform_14(%arg0: i32) -> (i32, i32) {
    %c0_i32 = arith.constant 0 : i32
    %c0_i32_0 = arith.constant 0 : i32
    %c0_i32_1 = arith.constant 0 : i32
    return %c0_i32, %c0_i32_0 : i32, i32
  }
  func.func @transform_15(%arg0: i32) -> (i32, i32) {
    %c0_i32 = arith.constant 0 : i32
    %c0_i32_0 = arith.constant 0 : i32
    %c0_i32_1 = arith.constant 0 : i32
    return %c0_i32, %c0_i32_0 : i32, i32
  }
  func.func @transform_16(%arg0: i32) -> (i32, i32) {
    %c0_i32 = arith.constant 0 : i32
    %c0_i32_0 = arith.constant 0 : i32
    %c0_i32_1 = arith.constant 0 : i32
    return %c0_i32, %c0_i32_0 : i32, i32
  }
  func.func @transform_17(%arg0: i32) -> (i32, i32) {
    %c0_i32 = arith.constant 0 : i32
    %c0_i32_0 = arith.constant 0 : i32
    %c0_i32_1 = arith.constant 0 : i32
    return %c0_i32, %c0_i32_0 : i32, i32
  }
  func.func @transform_18(%arg0: i32) -> (i32, i32) {
    %c0_i32 = arith.constant 0 : i32
    %c0_i32_0 = arith.constant 0 : i32
    %c0_i32_1 = arith.constant 0 : i32
    return %c0_i32, %c0_i32_0 : i32, i32
  }
  func.func @transform_19(%arg0: i32) -> (i32, i32) {
    %c0_i32 = arith.constant 0 : i32
    %c0_i32_0 = arith.constant 0 : i32
    %c0_i32_1 = arith.constant 0 : i32
    return %c0_i32, %c0_i32_0 : i32, i32
  }
  func.func @transform_20(%arg0: i32) -> (i32, i32) {
    %c0_i32 = arith.constant 0 : i32
    %c0_i32_0 = arith.constant 0 : i32
    %c0_i32_1 = arith.constant 0 : i32
    return %c0_i32, %c0_i32_0 : i32, i32
  }
  func.func @transform_21(%arg0: i32) -> (i32, i32, i32) {
    %c0_i32 = arith.constant 0 : i32
    %c0_i32_0 = arith.constant 0 : i32
    %c0_i32_1 = arith.constant 0 : i32
    return %arg0, %c0_i32, %c0_i32_0 : i32, i32, i32
  }
}

</mosaic_0001>

<llo_original>
// kernel: tpu_custom_call.1
$region0: #{tpu_custom_call.1}
  #allocation0 [shape = 'u32[]', space=smem, size = 0x4, offset = 0x4, fixed_abs, tag = 'smem constant byte address 0x4 - core index']
  #allocation1 [shape = 'u32[144,128]{1,0:T(1,128)}', space=vmem, size = 0x12000, scoped, tag = 'internal scratch']
  %s0 = inlined_call_operand.vmem [shape: f32[2,8,256], index: 0, kind: input, shape index: {}]
  %s1 = inlined_call_operand.vmem [shape: f32[8,72], index: 1, kind: input, shape index: {}]
  %s2 = inlined_call_operand.vmem [shape: f32[8,1], index: 2, kind: input, shape index: {}]
  %s3 = inlined_call_operand.vmem [shape: f32[8,1], index: 3, kind: input, shape index: {}]
  %s4 = inlined_call_operand.vmem [shape: f32[8,72], index: 4, kind: input, shape index: {}]
  %s5 = inlined_call_operand.vmem [shape: f32[8,1], index: 5, kind: input, shape index: {}]
  %s6 = inlined_call_operand.vmem [shape: f32[8,1], index: 6, kind: input, shape index: {}]
  %s7 = inlined_call_operand.vmem [shape: f32[8,24], index: 7, kind: input, shape index: {}]
  %s8 = inlined_call_operand.vmem [shape: f32[8,1], index: 8, kind: input, shape index: {}]
  %s9 = inlined_call_operand.vmem [shape: f32[8,24], index: 9, kind: input, shape index: {}]
  %s10 = inlined_call_operand.vmem [shape: f32[8,1], index: 10, kind: input, shape index: {}]
  %s11 = inlined_call_operand.vmem [shape: f32[8,24], index: 11, kind: input, shape index: {}]
  %s12 = inlined_call_operand.vmem [shape: f32[8,1], index: 12, kind: input, shape index: {}]
  %s13 = inlined_call_operand.vmem [shape: f32[8,24], index: 13, kind: input, shape index: {}]
  %s14 = inlined_call_operand.vmem [shape: f32[8,1], index: 14, kind: input, shape index: {}]
  %s15 = inlined_call_operand.vmem [shape: f32[256,16], index: 15, kind: input, shape index: {}]
  %s16 = inlined_call_operand.vmem [shape: f32[256,16], index: 16, kind: input, shape index: {}]
  %s17 = inlined_call_operand.vmem [shape: f32[16,256], index: 17, kind: input, shape index: {}]
  %s18 = inlined_call_operand.vmem [shape: f32[16,256], index: 18, kind: input, shape index: {}]
  %s19 = inlined_call_operand.vmem [shape: f32[1,256], index: 19, kind: input, shape index: {}]
  %s20 = inlined_call_operand.vmem [shape: f32[1,256], index: 20, kind: input, shape index: {}]
  %s21 = inlined_call_operand.hbm [shape: f32[2,8,256], index: 21, kind: output, shape index: {}]
  %s22 = sld [smem:[#allocation0]]
  $region117: #{tpu_custom_call.1} parent=0
    _
  %s24 = ssub.s32 1, %s22
  %s25 = scalar_select 0, %s24, %s22
  $region1: #{tpu_custom_call.1} parent=0
    #allocation2 [shape = 'u8[16384]{0}', space=vmem, size = 0x4000, scoped, tag = 'output window, operand 0']
    #allocation3 [shape = 's32[2]{0}', space=sflag, size = 0x8, scoped, tag = 'scoped memory for tpu_custom_call.1']
    %26 = vsyncpa [#allocation3], 0
    %s27 = scalar_lea.sflag [#allocation3], 1
    %28 = vsyncpa %s27, 0
    loop: start=0, step=1, limit=4
    $region2: #{tpu_custom_call.1} parent=1 // loop_pre_header
      _
    $region3: #{tpu_custom_call.1} parent=1 // loop_header
      %s30 = sphi 0, %s34
      %p31 = scmp.ge.s32.totalorder %s30, 4
      %s40 = sphi 0, %s42
      %s43 = sphi 0, %s40
      %s44 = sphi 0, %s43
      %s60 = sphi 0, %s44
      %s64 = sphi 0, %s64
      %s66 = sphi 0, %s64
      %s67 = sphi 0, %s66
      %s81 = sphi 0, %s67
      %s85 = sphi 0, %s85
      %s87 = sphi 0, %s85
      %s88 = sphi 0, %s87
      %s102 = sphi 0, %s88
      %s106 = sphi 0, %s106
      %s108 = sphi 0, %s106
      %s109 = sphi 0, %s108
      %s123 = sphi 0, %s109
      %s127 = sphi 0, %s127
      %s129 = sphi 0, %s127
      %s130 = sphi 0, %s129
      %s144 = sphi 0, %s130
      %s148 = sphi 0, %s148
      %s150 = sphi 0, %s148
      %s151 = sphi 0, %s150
      %s165 = sphi 0, %s151
      %s169 = sphi 0, %s169
      %s171 = sphi 0, %s169
      %s172 = sphi 0, %s171
      %s186 = sphi 0, %s172
      %s190 = sphi 0, %s190
      %s192 = sphi 0, %s190
      %s193 = sphi 0, %s192
      %s207 = sphi 0, %s193
      %s211 = sphi 0, %s211
      %s213 = sphi 0, %s211
      %s214 = sphi 0, %s213
      %s228 = sphi 0, %s214
      %s232 = sphi 0, %s232
      %s234 = sphi 0, %s232
      %s235 = sphi 0, %s234
      %s249 = sphi 0, %s235
      %s253 = sphi 0, %s253
      %s255 = sphi 0, %s253
      %s256 = sphi 0, %s255
      %s270 = sphi 0, %s256
      %s274 = sphi 0, %s274
      %s276 = sphi 0, %s274
      %s277 = sphi 0, %s276
      %s291 = sphi 0, %s277
      %s295 = sphi 0, %s295
      %s297 = sphi 0, %s295
      %s298 = sphi 0, %s297
      %s312 = sphi 0, %s298
      %s316 = sphi 0, %s316
      %s318 = sphi 0, %s316
      %s319 = sphi 0, %s318
      %s333 = sphi 0, %s319
      %s337 = sphi 0, %s337
      %s339 = sphi 0, %s337
      %s340 = sphi 0, %s339
      %s354 = sphi 0, %s340
      %s358 = sphi 0, %s358
      %s360 = sphi 0, %s358
      %s361 = sphi 0, %s360
      %s375 = sphi 0, %s361
      %s379 = sphi 0, %s379
      %s381 = sphi 0, %s379
      %s382 = sphi 0, %s381
      %s396 = sphi 0, %s382
      %s400 = sphi 0, %s400
      %s402 = sphi 0, %s400
      %s403 = sphi 0, %s402
      %s417 = sphi 0, %s403
      %s421 = sphi 0, %s421
      %s423 = sphi 0, %s421
      %s424 = sphi 0, %s423
      %s438 = sphi 0, %s424
      %s442 = sphi 0, %s442
      %s444 = sphi 0, %s442
      %s445 = sphi 0, %s444
      %s459 = sphi 0, %s445
      %s463 = sphi 0, %s463
      %s465 = sphi 0, %s463
      %s466 = sphi 0, %s465
      %s480 = sphi 0, %s466
      %s486 = sphi 0, %s488
      %s489 = sphi 0, %s486
      %s490 = sphi 0, %s489
      %s506 = sphi 0, %s490
    $region4: #{tpu_custom_call.1} parent=1 // loop_header_branch
      %33 = sbr.rel (%p31) target = $region8
    $region5: #{tpu_custom_call.1} parent=1 // loop_body
      %s35 = ssub.s32 %s30, 1
      %s36 = ssub.s32 %s30, 2
      %s37 = sadd.s32 %s30, 1
      %s38 = ssub.s32 %s30, %s37
      %p39 = scmp.eq.s32.totalorder %s38, 0
      %s41 = sadd.s32 %s40, 1
      %s42 = scalar_select %p39, %s40, %s41
      %p45 = pneg %p39
      %p46 = scmp.eq.s32.totalorder %s30, 1
      %p47 = por %p45, %p46
      %p48 = scmp.ne.s32.totalorder %s40, %s43
      %p49 = scmp.eq.s32.totalorder %s30, 0
      %p50 = por %p48, %p49
      %p51 = scmp.ne.s32.totalorder %s40, %s43
      %p52 = scmp.eq.s32.totalorder %s35, 1
      %p53 = por %p51, %p52
      %p54 = scmp.ne.s32.totalorder %s43, %s44
      %p55 = scmp.eq.s32.totalorder %s35, 0
      %p56 = por %p54, %p55
      %p57 = scmp.ne.s32.totalorder %s43, %s44
      %p58 = scmp.eq.s32.totalorder %s36, 1
      %p59 = por %p57, %p58
      %p61 = scmp.ne.s32.totalorder %s44, %s60
      %p62 = scmp.eq.s32.totalorder %s36, 0
      %p63 = por %p61, %p62
      %s65 = sadd.s32 %s64, 1
      %p68 = scmp.eq.s32.totalorder %s30, 1
      %p69 = scmp.ne.s32.totalorder %s64, %s66
      %p70 = scmp.eq.s32.totalorder %s30, 0
      %p71 = por %p69, %p70
      %p72 = scmp.ne.s32.totalorder %s64, %s66
      %p73 = scmp.eq.s32.totalorder %s35, 1
      %p74 = por %p72, %p73
      %p75 = scmp.ne.s32.totalorder %s66, %s67
      %p76 = scmp.eq.s32.totalorder %s35, 0
      %p77 = por %p75, %p76
      %p78 = scmp.ne.s32.totalorder %s66, %s67
      %p79 = scmp.eq.s32.totalorder %s36, 1
      %p80 = por %p78, %p79
      %p82 = scmp.ne.s32.totalorder %s67, %s81
      %p83 = scmp.eq.s32.totalorder %s36, 0
      %p84 = por %p82, %p83
      %s86 = sadd.s32 %s85, 1
      %p89 = scmp.eq.s32.totalorder %s30, 1
      %p90 = scmp.ne.s32.totalorder %s85, %s87
      %p91 = scmp.eq.s32.totalorder %s30, 0
      %p92 = por %p90, %p91
      %p93 = scmp.ne.s32.totalorder %s85, %s87
      %p94 = scmp.eq.s32.totalorder %s35, 1
      %p95 = por %p93, %p94
      %p96 = scmp.ne.s32.totalorder %s87, %s88
      %p97 = scmp.eq.s32.totalorder %s35, 0
      %p98 = por %p96, %p97
      %p99 = scmp.ne.s32.totalorder %s87, %s88
      %p100 = scmp.eq.s32.totalorder %s36, 1
      %p101 = por %p99, %p100
      %p103 = scmp.ne.s32.totalorder %s88, %s102
      %p104 = scmp.eq.s32.totalorder %s36, 0
      %p105 = por %p103, %p104
      %s107 = sadd.s32 %s106, 1
      %p110 = scmp.eq.s32.totalorder %s30, 1
      %p111 = scmp.ne.s32.totalorder %s106, %s108
      %p112 = scmp.eq.s32.totalorder %s30, 0
      %p113 = por %p111, %p112
      %p114 = scmp.ne.s32.totalorder %s106, %s108
      %p115 = scmp.eq.s32.totalorder %s35, 1
      %p116 = por %p114, %p115
      %p117 = scmp.ne.s32.totalorder %s108, %s109
      %p118 = scmp.eq.s32.totalorder %s35, 0
      %p119 = por %p117, %p118
      %p120 = scmp.ne.s32.totalorder %s108, %s109
      %p121 = scmp.eq.s32.totalorder %s36, 1
      %p122 = por %p120, %p121
      %p124 = scmp.ne.s32.totalorder %s109, %s123
      %p125 = scmp.eq.s32.totalorder %s36, 0
      %p126 = por %p124, %p125
      %s128 = sadd.s32 %s127, 1
      %p131 = scmp.eq.s32.totalorder %s30, 1
      %p132 = scmp.ne.s32.totalorder %s127, %s129
      %p133 = scmp.eq.s32.totalorder %s30, 0
      %p134 = por %p132, %p133
      %p135 = scmp.ne.s32.totalorder %s127, %s129
      %p136 = scmp.eq.s32.totalorder %s35, 1
      %p137 = por %p135, %p136
      %p138 = scmp.ne.s32.totalorder %s129, %s130
      %p139 = scmp.eq.s32.totalorder %s35, 0
      %p140 = por %p138, %p139
      %p141 = scmp.ne.s32.totalorder %s129, %s130
      %p142 = scmp.eq.s32.totalorder %s36, 1
      %p143 = por %p141, %p142
      %p145 = scmp.ne.s32.totalorder %s130, %s144
      %p146 = scmp.eq.s32.totalorder %s36, 0
      %p147 = por %p145, %p146
      %s149 = sadd.s32 %s148, 1
      %p152 = scmp.eq.s32.totalorder %s30, 1
      %p153 = scmp.ne.s32.totalorder %s148, %s150
      %p154 = scmp.eq.s32.totalorder %s30, 0
      %p155 = por %p153, %p154
      %p156 = scmp.ne.s32.totalorder %s148, %s150
      %p157 = scmp.eq.s32.totalorder %s35, 1
      %p158 = por %p156, %p157
      %p159 = scmp.ne.s32.totalorder %s150, %s151
      %p160 = scmp.eq.s32.totalorder %s35, 0
      %p161 = por %p159, %p160
      %p162 = scmp.ne.s32.totalorder %s150, %s151
      %p163 = scmp.eq.s32.totalorder %s36, 1
      %p164 = por %p162, %p163
      %p166 = scmp.ne.s32.totalorder %s151, %s165
      %p167 = scmp.eq.s32.totalorder %s36, 0
      %p168 = por %p166, %p167
      %s170 = sadd.s32 %s169, 1
      %p173 = scmp.eq.s32.totalorder %s30, 1
      %p174 = scmp.ne.s32.totalorder %s169, %s171
      %p175 = scmp.eq.s32.totalorder %s30, 0
      %p176 = por %p174, %p175
      %p177 = scmp.ne.s32.totalorder %s169, %s171
      %p178 = scmp.eq.s32.totalorder %s35, 1
      %p179 = por %p177, %p178
      %p180 = scmp.ne.s32.totalorder %s171, %s172
      %p181 = scmp.eq.s32.totalorder %s35, 0
      %p182 = por %p180, %p181
      %p183 = scmp.ne.s32.totalorder %s171, %s172
      %p184 = scmp.eq.s32.totalorder %s36, 1
      %p185 = por %p183, %p184
      %p187 = scmp.ne.s32.totalorder %s172, %s186
      %p188 = scmp.eq.s32.totalorder %s36, 0
      %p189 = por %p187, %p188
      %s191 = sadd.s32 %s190, 1
      %p194 = scmp.eq.s32.totalorder %s30, 1
      %p195 = scmp.ne.s32.totalorder %s190, %s192
      %p196 = scmp.eq.s32.totalorder %s30, 0
      %p197 = por %p195, %p196
      %p198 = scmp.ne.s32.totalorder %s190, %s192
      %p199 = scmp.eq.s32.totalorder %s35, 1
      %p200 = por %p198, %p199
      %p201 = scmp.ne.s32.totalorder %s192, %s193
      %p202 = scmp.eq.s32.totalorder %s35, 0
      %p203 = por %p201, %p202
      %p204 = scmp.ne.s32.totalorder %s192, %s193
      %p205 = scmp.eq.s32.totalorder %s36, 1
      %p206 = por %p204, %p205
      %p208 = scmp.ne.s32.totalorder %s193, %s207
      %p209 = scmp.eq.s32.totalorder %s36, 0
      %p210 = por %p208, %p209
      %s212 = sadd.s32 %s211, 1
      %p215 = scmp.eq.s32.totalorder %s30, 1
      %p216 = scmp.ne.s32.totalorder %s211, %s213
      %p217 = scmp.eq.s32.totalorder %s30, 0
      %p218 = por %p216, %p217
      %p219 = scmp.ne.s32.totalorder %s211, %s213
      %p220 = scmp.eq.s32.totalorder %s35, 1
      %p221 = por %p219, %p220
      %p222 = scmp.ne.s32.totalorder %s213, %s214
      %p223 = scmp.eq.s32.totalorder %s35, 0
      %p224 = por %p222, %p223
      %p225 = scmp.ne.s32.totalorder %s213, %s214
      %p226 = scmp.eq.s32.totalorder %s36, 1
      %p227 = por %p225, %p226
      %p229 = scmp.ne.s32.totalorder %s214, %s228
      %p230 = scmp.eq.s32.totalorder %s36, 0
      %p231 = por %p229, %p230
      %s233 = sadd.s32 %s232, 1
      %p236 = scmp.eq.s32.totalorder %s30, 1
      %p237 = scmp.ne.s32.totalorder %s232, %s234
      %p238 = scmp.eq.s32.totalorder %s30, 0
      %p239 = por %p237, %p238
      %p240 = scmp.ne.s32.totalorder %s232, %s234
      %p241 = scmp.eq.s32.totalorder %s35, 1
      %p242 = por %p240, %p241
      %p243 = scmp.ne.s32.totalorder %s234, %s235
      %p244 = scmp.eq.s32.totalorder %s35, 0
      %p245 = por %p243, %p244
      %p246 = scmp.ne.s32.totalorder %s234, %s235
      %p247 = scmp.eq.s32.totalorder %s36, 1
      %p248 = por %p246, %p247
      %p250 = scmp.ne.s32.totalorder %s235, %s249
      %p251 = scmp.eq.s32.totalorder %s36, 0
      %p252 = por %p250, %p251
      %s254 = sadd.s32 %s253, 1
      %p257 = scmp.eq.s32.totalorder %s30, 1
      %p258 = scmp.ne.s32.totalorder %s253, %s255
      %p259 = scmp.eq.s32.totalorder %s30, 0
      %p260 = por %p258, %p259
      %p261 = scmp.ne.s32.totalorder %s253, %s255
      %p262 = scmp.eq.s32.totalorder %s35, 1
      %p263 = por %p261, %p262
      %p264 = scmp.ne.s32.totalorder %s255, %s256
      %p265 = scmp.eq.s32.totalorder %s35, 0
      %p266 = por %p264, %p265
      %p267 = scmp.ne.s32.totalorder %s255, %s256
      %p268 = scmp.eq.s32.totalorder %s36, 1
      %p269 = por %p267, %p268
      %p271 = scmp.ne.s32.totalorder %s256, %s270
      %p272 = scmp.eq.s32.totalorder %s36, 0
      %p273 = por %p271, %p272
      %s275 = sadd.s32 %s274, 1
      %p278 = scmp.eq.s32.totalorder %s30, 1
      %p279 = scmp.ne.s32.totalorder %s274, %s276
      %p280 = scmp.eq.s32.totalorder %s30, 0
      %p281 = por %p279, %p280
      %p282 = scmp.ne.s32.totalorder %s274, %s276
      %p283 = scmp.eq.s32.totalorder %s35, 1
      %p284 = por %p282, %p283
      %p285 = scmp.ne.s32.totalorder %s276, %s277
      %p286 = scmp.eq.s32.totalorder %s35, 0
      %p287 = por %p285, %p286
      %p288 = scmp.ne.s32.totalorder %s276, %s277
      %p289 = scmp.eq.s32.totalorder %s36, 1
      %p290 = por %p288, %p289
      %p292 = scmp.ne.s32.totalorder %s277, %s291
      %p293 = scmp.eq.s32.totalorder %s36, 0
      %p294 = por %p292, %p293
      %s296 = sadd.s32 %s295, 1
      %p299 = scmp.eq.s32.totalorder %s30, 1
      %p300 = scmp.ne.s32.totalorder %s295, %s297
      %p301 = scmp.eq.s32.totalorder %s30, 0
      %p302 = por %p300, %p301
      %p303 = scmp.ne.s32.totalorder %s295, %s297
      %p304 = scmp.eq.s32.totalorder %s35, 1
      %p305 = por %p303, %p304
      %p306 = scmp.ne.s32.totalorder %s297, %s298
      %p307 = scmp.eq.s32.totalorder %s35, 0
      %p308 = por %p306, %p307
      %p309 = scmp.ne.s32.totalorder %s297, %s298
      %p310 = scmp.eq.s32.totalorder %s36, 1
      %p311 = por %p309, %p310
      %p313 = scmp.ne.s32.totalorder %s298, %s312
      %p314 = scmp.eq.s32.totalorder %s36, 0
      %p315 = por %p313, %p314
      %s317 = sadd.s32 %s316, 1
      %p320 = scmp.eq.s32.totalorder %s30, 1
      %p321 = scmp.ne.s32.totalorder %s316, %s318
      %p322 = scmp.eq.s32.totalorder %s30, 0
      %p323 = por %p321, %p322
      %p324 = scmp.ne.s32.totalorder %s316, %s318
      %p325 = scmp.eq.s32.totalorder %s35, 1
      %p326 = por %p324, %p325
      %p327 = scmp.ne.s32.totalorder %s318, %s319
      %p328 = scmp.eq.s32.totalorder %s35, 0
      %p329 = por %p327, %p328
      %p330 = scmp.ne.s32.totalorder %s318, %s319
      %p331 = scmp.eq.s32.totalorder %s36, 1
      %p332 = por %p330, %p331
      %p334 = scmp.ne.s32.totalorder %s319, %s333
      %p335 = scmp.eq.s32.totalorder %s36, 0
      %p336 = por %p334, %p335
      %s338 = sadd.s32 %s337, 1
      %p341 = scmp.eq.s32.totalorder %s30, 1
      %p342 = scmp.ne.s32.totalorder %s337, %s339
      %p343 = scmp.eq.s32.totalorder %s30, 0
      %p344 = por %p342, %p343
      %p345 = scmp.ne.s32.totalorder %s337, %s339
      %p346 = scmp.eq.s32.totalorder %s35, 1
      %p347 = por %p345, %p346
      %p348 = scmp.ne.s32.totalorder %s339, %s340
      %p349 = scmp.eq.s32.totalorder %s35, 0
      %p350 = por %p348, %p349
      %p351 = scmp.ne.s32.totalorder %s339, %s340
      %p352 = scmp.eq.s32.totalorder %s36, 1
      %p353 = por %p351, %p352
      %p355 = scmp.ne.s32.totalorder %s340, %s354
      %p356 = scmp.eq.s32.totalorder %s36, 0
      %p357 = por %p355, %p356
      %s359 = sadd.s32 %s358, 1
      %p362 = scmp.eq.s32.totalorder %s30, 1
      %p363 = scmp.ne.s32.totalorder %s358, %s360
      %p364 = scmp.eq.s32.totalorder %s30, 0
      %p365 = por %p363, %p364
      %p366 = scmp.ne.s32.totalorder %s358, %s360
      %p367 = scmp.eq.s32.totalorder %s35, 1
      %p368 = por %p366, %p367
      %p369 = scmp.ne.s32.totalorder %s360, %s361
      %p370 = scmp.eq.s32.totalorder %s35, 0
      %p371 = por %p369, %p370
      %p372 = scmp.ne.s32.totalorder %s360, %s361
      %p373 = scmp.eq.s32.totalorder %s36, 1
      %p374 = por %p372, %p373
      %p376 = scmp.ne.s32.totalorder %s361, %s375
      %p377 = scmp.eq.s32.totalorder %s36, 0
      %p378 = por %p376, %p377
      %s380 = sadd.s32 %s379, 1
      %p383 = scmp.eq.s32.totalorder %s30, 1
      %p384 = scmp.ne.s32.totalorder %s379, %s381
      %p385 = scmp.eq.s32.totalorder %s30, 0
      %p386 = por %p384, %p385
      %p387 = scmp.ne.s32.totalorder %s379, %s381
      %p388 = scmp.eq.s32.totalorder %s35, 1
      %p389 = por %p387, %p388
      %p390 = scmp.ne.s32.totalorder %s381, %s382
      %p391 = scmp.eq.s32.totalorder %s35, 0
      %p392 = por %p390, %p391
      %p393 = scmp.ne.s32.totalorder %s381, %s382
      %p394 = scmp.eq.s32.totalorder %s36, 1
      %p395 = por %p393, %p394
      %p397 = scmp.ne.s32.totalorder %s382, %s396
      %p398 = scmp.eq.s32.totalorder %s36, 0
      %p399 = por %p397, %p398
      %s401 = sadd.s32 %s400, 1
      %p404 = scmp.eq.s32.totalorder %s30, 1
      %p405 = scmp.ne.s32.totalorder %s400, %s402
      %p406 = scmp.eq.s32.totalorder %s30, 0
      %p407 = por %p405, %p406
      %p408 = scmp.ne.s32.totalorder %s400, %s402
      %p409 = scmp.eq.s32.totalorder %s35, 1
      %p410 = por %p408, %p409
      %p411 = scmp.ne.s32.totalorder %s402, %s403
      %p412 = scmp.eq.s32.totalorder %s35, 0
      %p413 = por %p411, %p412
      %p414 = scmp.ne.s32.totalorder %s402, %s403
      %p415 = scmp.eq.s32.totalorder %s36, 1
      %p416 = por %p414, %p415
      %p418 = scmp.ne.s32.totalorder %s403, %s417
      %p419 = scmp.eq.s32.totalorder %s36, 0
      %p420 = por %p418, %p419
      %s422 = sadd.s32 %s421, 1
      %p425 = scmp.eq.s32.totalorder %s30, 1
      %p426 = scmp.ne.s32.totalorder %s421, %s423
      %p427 = scmp.eq.s32.totalorder %s30, 0
      %p428 = por %p426, %p427
      %p429 = scmp.ne.s32.totalorder %s421, %s423
      %p430 = scmp.eq.s32.totalorder %s35, 1
      %p431 = por %p429, %p430
      %p432 = scmp.ne.s32.totalorder %s423, %s424
      %p433 = scmp.eq.s32.totalorder %s35, 0
      %p434 = por %p432, %p433
      %p435 = scmp.ne.s32.totalorder %s423, %s424
      %p436 = scmp.eq.s32.totalorder %s36, 1
      %p437 = por %p435, %p436
      %p439 = scmp.ne.s32.totalorder %s424, %s438
      %p440 = scmp.eq.s32.totalorder %s36, 0
      %p441 = por %p439, %p440
      %s443 = sadd.s32 %s442, 1
      %p446 = scmp.eq.s32.totalorder %s30, 1
      %p447 = scmp.ne.s32.totalorder %s442, %s444
      %p448 = scmp.eq.s32.totalorder %s30, 0
      %p449 = por %p447, %p448
      %p450 = scmp.ne.s32.totalorder %s442, %s444
      %p451 = scmp.eq.s32.totalorder %s35, 1
      %p452 = por %p450, %p451
      %p453 = scmp.ne.s32.totalorder %s444, %s445
      %p454 = scmp.eq.s32.totalorder %s35, 0
      %p455 = por %p453, %p454
      %p456 = scmp.ne.s32.totalorder %s444, %s445
      %p457 = scmp.eq.s32.totalorder %s36, 1
      %p458 = por %p456, %p457
      %p460 = scmp.ne.s32.totalorder %s445, %s459
      %p461 = scmp.eq.s32.totalorder %s36, 0
      %p462 = por %p460, %p461
      %s464 = sadd.s32 %s463, 1
      %p467 = scmp.eq.s32.totalorder %s30, 1
      %p468 = scmp.ne.s32.totalorder %s463, %s465
      %p469 = scmp.eq.s32.totalorder %s30, 0
      %p470 = por %p468, %p469
      %p471 = scmp.ne.s32.totalorder %s463, %s465
      %p472 = scmp.eq.s32.totalorder %s35, 1
      %p473 = por %p471, %p472
      %p474 = scmp.ne.s32.totalorder %s465, %s466
      %p475 = scmp.eq.s32.totalorder %s35, 0
      %p476 = por %p474, %p475
      %p477 = scmp.ne.s32.totalorder %s465, %s466
      %p478 = scmp.eq.s32.totalorder %s36, 1
      %p479 = por %p477, %p478
      %p481 = scmp.ne.s32.totalorder %s466, %s480
      %p482 = scmp.eq.s32.totalorder %s36, 0
      %p483 = por %p481, %p482
      %s484 = ssub.s32 %s30, %s37
      %p485 = scmp.eq.s32.totalorder %s484, 0
      %s487 = sadd.s32 %s486, 1
      %s488 = scalar_select %p485, %s486, %s487
      %p491 = pneg %p485
      %p492 = scmp.eq.s32.totalorder %s30, 1
      %p493 = por %p491, %p492
      %p494 = scmp.ne.s32.totalorder %s486, %s489
      %p495 = scmp.eq.s32.totalorder %s30, 0
      %p496 = por %p494, %p495
      %p497 = scmp.ne.s32.totalorder %s486, %s489
      %p498 = scmp.eq.s32.totalorder %s35, 1
      %p499 = por %p497, %p498
      %p500 = scmp.ne.s32.totalorder %s489, %s490
      %p501 = scmp.eq.s32.totalorder %s35, 0
      %p502 = por %p500, %p501
      %p503 = scmp.ne.s32.totalorder %s489, %s490
      %p504 = scmp.eq.s32.totalorder %s36, 1
      %p505 = por %p503, %p504
      %p507 = scmp.ne.s32.totalorder %s490, %s506
      %p508 = scmp.eq.s32.totalorder %s36, 0
      %p509 = por %p507, %p508
      %p510 = scmp.le.s32.totalorder 1, %s30
      %p511 = scmp.lt.s32.totalorder %s30, 3
      %p512 = pnand %p510, %p511
      %p513 = pneg %p512
      // Predicated region
      $region9: #{tpu_custom_call.1} parent=5 // pred_check
        _
      $region10: #{tpu_custom_call.1} parent=5 // pred_check_branch
        %515 = sbr.rel (%p512) target = $region12
      $region11: #{tpu_custom_call.1} parent=5 // pred_region
        %s516 = ssub.s32 %s30, 1
        // Predicated region
        $region13: #{tpu_custom_call.1} parent=11 // pred_check
          %p517 = pneg %p77
        $region14: #{tpu_custom_call.1} parent=11 // pred_check_branch
          %519 = sbr.rel (%p517) target = $region16
        $region15: #{tpu_custom_call.1} parent=11 // pred_region
          _
        $region16: #{tpu_custom_call.1} parent=11 // pred_fallthru
          _
        // Predicated region
        $region17: #{tpu_custom_call.1} parent=11 // pred_check
          %p520 = pneg %p98
        $region18: #{tpu_custom_call.1} parent=11 // pred_check_branch
          %522 = sbr.rel (%p520) target = $region20
        $region19: #{tpu_custom_call.1} parent=11 // pred_region
          _
        $region20: #{tpu_custom_call.1} parent=11 // pred_fallthru
          _
        // Predicated region
        $region21: #{tpu_custom_call.1} parent=11 // pred_check
          %p523 = pneg %p119
        $region22: #{tpu_custom_call.1} parent=11 // pred_check_branch
          %525 = sbr.rel (%p523) target = $region24
        $region23: #{tpu_custom_call.1} parent=11 // pred_region
          _
        $region24: #{tpu_custom_call.1} parent=11 // pred_fallthru
          _
        // Predicated region
        $region25: #{tpu_custom_call.1} parent=11 // pred_check
          %p526 = pneg %p140
        $region26: #{tpu_custom_call.1} parent=11 // pred_check_branch
          %528 = sbr.rel (%p526) target = $region28
        $region27: #{tpu_custom_call.1} parent=11 // pred_region
          _
        $region28: #{tpu_custom_call.1} parent=11 // pred_fallthru
          _
        // Predicated region
        $region29: #{tpu_custom_call.1} parent=11 // pred_check
          %p529 = pneg %p161
        $region30: #{tpu_custom_call.1} parent=11 // pred_check_branch
          %531 = sbr.rel (%p529) target = $region32
        $region31: #{tpu_custom_call.1} parent=11 // pred_region
          _
        $region32: #{tpu_custom_call.1} parent=11 // pred_fallthru
          _
        // Predicated region
        $region33: #{tpu_custom_call.1} parent=11 // pred_check
          %p532 = pneg %p182
        $region34: #{tpu_custom_call.1} parent=11 // pred_check_branch
          %534 = sbr.rel (%p532) target = $region36
        $region35: #{tpu_custom_call.1} parent=11 // pred_region
          _
        $region36: #{tpu_custom_call.1} parent=11 // pred_fallthru
          _
        // Predicated region
        $region37: #{tpu_custom_call.1} parent=11 // pred_check
          %p535 = pneg %p203
        $region38: #{tpu_custom_call.1} parent=11 // pred_check_branch
          %537 = sbr.rel (%p535) target = $region40
        $region39: #{tpu_custom_call.1} parent=11 // pred_region
          _
        $region40: #{tpu_custom_call.1} parent=11 // pred_fallthru
          _
        // Predicated region
        $region41: #{tpu_custom_call.1} parent=11 // pred_check
          %p538 = pneg %p224
        $region42: #{tpu_custom_call.1} parent=11 // pred_check_branch
          %540 = sbr.rel (%p538) target = $region44
        $region43: #{tpu_custom_call.1} parent=11 // pred_region
          _
        $region44: #{tpu_custom_call.1} parent=11 // pred_fallthru
          _
        // Predicated region
        $region45: #{tpu_custom_call.1} parent=11 // pred_check
          %p541 = pneg %p245
        $region46: #{tpu_custom_call.1} parent=11 // pred_check_branch
          %543 = sbr.rel (%p541) target = $region48
        $region47: #{tpu_custom_call.1} parent=11 // pred_region
          _
        $region48: #{tpu_custom_call.1} parent=11 // pred_fallthru
          _
        // Predicated region
        $region49: #{tpu_custom_call.1} parent=11 // pred_check
          %p544 = pneg %p266
        $region50: #{tpu_custom_call.1} parent=11 // pred_check_branch
          %546 = sbr.rel (%p544) target = $region52
        $region51: #{tpu_custom_call.1} parent=11 // pred_region
          _
        $region52: #{tpu_custom_call.1} parent=11 // pred_fallthru
          _
        // Predicated region
        $region53: #{tpu_custom_call.1} parent=11 // pred_check
          %p547 = pneg %p287
        $region54: #{tpu_custom_call.1} parent=11 // pred_check_branch
          %549 = sbr.rel (%p547) target = $region56
        $region55: #{tpu_custom_call.1} parent=11 // pred_region
          _
        $region56: #{tpu_custom_call.1} parent=11 // pred_fallthru
          _
        // Predicated region
        $region57: #{tpu_custom_call.1} parent=11 // pred_check
          %p550 = pneg %p308
        $region58: #{tpu_custom_call.1} parent=11 // pred_check_branch
          %552 = sbr.rel (%p550) target = $region60
        $region59: #{tpu_custom_call.1} parent=11 // pred_region
          _
        $region60: #{tpu_custom_call.1} parent=11 // pred_fallthru
          _
        // Predicated region
        $region61: #{tpu_custom_call.1} parent=11 // pred_check
          %p553 = pneg %p329
        $region62: #{tpu_custom_call.1} parent=11 // pred_check_branch
          %555 = sbr.rel (%p553) target = $region64
        $region63: #{tpu_custom_call.1} parent=11 // pred_region
          _
        $region64: #{tpu_custom_call.1} parent=11 // pred_fallthru
          _
        // Predicated region
        $region65: #{tpu_custom_call.1} parent=11 // pred_check
          %p556 = pneg %p350
        $region66: #{tpu_custom_call.1} parent=11 // pred_check_branch
          %558 = sbr.rel (%p556) target = $region68
        $region67: #{tpu_custom_call.1} parent=11 // pred_region
          _
        $region68: #{tpu_custom_call.1} parent=11 // pred_fallthru
          _
        // Predicated region
        $region69: #{tpu_custom_call.1} parent=11 // pred_check
          %p559 = pneg %p371
        $region70: #{tpu_custom_call.1} parent=11 // pred_check_branch
          %561 = sbr.rel (%p559) target = $region72
        $region71: #{tpu_custom_call.1} parent=11 // pred_region
          _
        $region72: #{tpu_custom_call.1} parent=11 // pred_fallthru
          _
        // Predicated region
        $region73: #{tpu_custom_call.1} parent=11 // pred_check
          %p562 = pneg %p392
        $region74: #{tpu_custom_call.1} parent=11 // pred_check_branch
          %564 = sbr.rel (%p562) target = $region76
        $region75: #{tpu_custom_call.1} parent=11 // pred_region
          _
        $region76: #{tpu_custom_call.1} parent=11 // pred_fallthru
          _
        // Predicated region
        $region77: #{tpu_custom_call.1} parent=11 // pred_check
          %p565 = pneg %p413
        $region78: #{tpu_custom_call.1} parent=11 // pred_check_branch
          %567 = sbr.rel (%p565) target = $region80
        $region79: #{tpu_custom_call.1} parent=11 // pred_region
          _
        $region80: #{tpu_custom_call.1} parent=11 // pred_fallthru
          _
        // Predicated region
        $region81: #{tpu_custom_call.1} parent=11 // pred_check
          %p568 = pneg %p434
        $region82: #{tpu_custom_call.1} parent=11 // pred_check_branch
          %570 = sbr.rel (%p568) target = $region84
        $region83: #{tpu_custom_call.1} parent=11 // pred_region
          _
        $region84: #{tpu_custom_call.1} parent=11 // pred_fallthru
          _
        // Predicated region
        $region85: #{tpu_custom_call.1} parent=11 // pred_check
          %p571 = pneg %p455
        $region86: #{tpu_custom_call.1} parent=11 // pred_check_branch
          %573 = sbr.rel (%p571) target = $region88
        $region87: #{tpu_custom_call.1} parent=11 // pred_region
          _
        $region88: #{tpu_custom_call.1} parent=11 // pred_fallthru
          _
        // Predicated region
        $region89: #{tpu_custom_call.1} parent=11 // pred_check
          %p574 = pneg %p476
        $region90: #{tpu_custom_call.1} parent=11 // pred_check_branch
          %576 = sbr.rel (%p574) target = $region92
        $region91: #{tpu_custom_call.1} parent=11 // pred_region
          _
        $region92: #{tpu_custom_call.1} parent=11 // pred_fallthru
          _
      $region12: #{tpu_custom_call.1} parent=5 // pred_fallthru
        _
      %p577 = scmp.lt.s32.totalorder %s30, 2
      // Predicated region
      $region93: #{tpu_custom_call.1} parent=5 // pred_check
        %p578 = pneg %p577
      $region94: #{tpu_custom_call.1} parent=5 // pred_check_branch
        %580 = sbr.rel (%p578) target = $region96
      $region95: #{tpu_custom_call.1} parent=5 // pred_region
        // Predicated region
        $region97: #{tpu_custom_call.1} parent=95 // pred_check
          %p581 = pneg %p50
        $region98: #{tpu_custom_call.1} parent=95 // pred_check_branch
          %583 = sbr.rel (%p581) target = $region100
        $region99: #{tpu_custom_call.1} parent=95 // pred_region
          %p584 = scmp.lt.s32.totalorder %s30, 1
          %s585 = scalar_select %p584, %s30, 1
          %s586 = smul.addr %s585, 2
          %s587 = smul.addr %s586, 8
          %s588 = scalar_lea.vmem %s0, %s587
        $region100: #{tpu_custom_call.1} parent=95 // pred_fallthru
          _
      $region96: #{tpu_custom_call.1} parent=5 // pred_fallthru
        _
      %p589 = scmp.le.s32.totalorder 1, %s30
      %p590 = scmp.lt.s32.totalorder %s30, 3
      %p591 = pnand %p589, %p590
      %p592 = pneg %p591
      // Predicated region
      $region101: #{tpu_custom_call.1} parent=5 // pred_check
        _
      $region102: #{tpu_custom_call.1} parent=5 // pred_check_branch
        %594 = sbr.rel (%p591) target = $region104
      $region103: #{tpu_custom_call.1} parent=5 // pred_region
        %s595 = ssub.s32 %s30, 1
        %p596 = scmp.lt.s32.totalorder %s35, 1
        %s597 = scalar_select %p596, %s35, 1
        %s598 = smul.addr %s597, 2
        %s599 = smul.addr %s598, 8
        %s600 = scalar_lea.vmem %s0, %s599
        %p601 = pneg %p56
        %p602 = pneg %p53
        %p603 = pneg %p77
        %p604 = pneg %p74
        %p605 = pneg %p98
        %p606 = pneg %p95
        %p607 = pneg %p119
        %p608 = pneg %p116
        %p609 = pneg %p140
        %p610 = pneg %p137
        %p611 = pneg %p161
        %p612 = pneg %p158
        %p613 = pneg %p182
        %p614 = pneg %p179
        %p615 = pneg %p203
        %p616 = pneg %p200
        %p617 = pneg %p224
        %p618 = pneg %p221
        %p619 = pneg %p245
        %p620 = pneg %p242
        %p621 = pneg %p266
        %p622 = pneg %p263
        %p623 = pneg %p287
        %p624 = pneg %p284
        %p625 = pneg %p308
        %p626 = pneg %p305
        %p627 = pneg %p329
        %p628 = pneg %p326
        %p629 = pneg %p350
        %p630 = pneg %p347
        %p631 = pneg %p371
        %p632 = pneg %p368
        %p633 = pneg %p392
        %p634 = pneg %p389
        %p635 = pneg %p413
        %p636 = pneg %p410
        %p637 = pneg %p434
        %p638 = pneg %p431
        %p639 = pneg %p455
        %p640 = pneg %p452
        %p641 = pneg %p476
        %p642 = pneg %p473
        %p643 = pneg %p502
        %p644 = pneg %p499
        %s645 = sand.u32 %s489, 1
        %s646 = scalar_lea.sflag [#allocation3], %s645
        %s647 = sand.u32 %s489, 1
        %s648 = smul.addr %s647, 16
        %s649 = scalar_lea.vmem [#allocation2], %s648
        %p650 = scmp.lt.s32.totalorder %s35, 1
        %s651 = scalar_select %p650, %s35, 1
        %s652 = smul.addr %s651, 2
        %s653 = smul.addr %s652, 8
        %s654 = scalar_lea.vmem %s0, %s653
        %v655 = vld [vmem:[%s654] sm:$0xff]
        %v656 = vld [vmem:[%s654 + $0x8] sm:$0xff]
        %v657 = vld [vmem:[%s19] sm:$0x3]
        %v658 = vld [vmem:[%s20] sm:$0x3]
        %v659 = vld [vmem:[%s1] sm:$0xff]
        %662 = vrot.lane.b32.xlu0 %v655, 17
        %v663 = vpop.permute.xlu0 %662
        %664 = vrot.lane.b32.xlu0 %v656, 17
        %v665 = vpop.permute.xlu0 %664
        %vm666 = vcmask 138240
        %v667 = vsel %vm666, %v663, %v665
        %v670 = vsel %vm666, 0.0, %v663
        %v672 = vlaneseq
        %v673 = vshrl.u32 %v672, 7
        %v674 = vsub.s32 0, %v673
        %v675 = vrot.slane %v657, %v674
        %v676 = vlaneseq
        %v677 = vshrl.u32 %v676, 7
        %v678 = vsub.s32 1, %v677
        %v679 = vrot.slane %v657, %v678
        %v682 = vmul.f32 %v670, %v675
        %v683 = vmul.f32 %v667, %v679
        %684 = vrot.lane.b32.xlu0 %v655, 16
        %v685 = vpop.permute.xlu0 %684
        %686 = vrot.lane.b32.xlu0 %v656, 16
        %v687 = vpop.permute.xlu0 %686
        %vm688 = vcmask 130048
        %v689 = vsel %vm688, %v685, %v687
        %v692 = vsel %vm688, 0.0, %v685
        %693 = vrot.lane.b32.xlu0 %v655, 15
        %v694 = vpop.permute.xlu0 %693
        %695 = vrot.lane.b32.xlu0 %v656, 15
        %v696 = vpop.permute.xlu0 %695
        %vm697 = vcmask 121856
        %v698 = vsel %vm697, %v694, %v696
        %v701 = vsel %vm697, 0.0, %v694
        %v703 = vlaneseq
        %v704 = vshrl.u32 %v703, 7
        %v705 = vsub.s32 0, %v704
        %v706 = vrot.slane %v658, %v705
        %v707 = vlaneseq
        %v708 = vshrl.u32 %v707, 7
        %v709 = vsub.s32 1, %v708
        %v710 = vrot.slane %v658, %v709
        %v713 = vmul.f32 %v701, %v706
        %v714 = vmul.f32 %v698, %v710
        %715 = vrot.lane.b32.xlu0 %v655, 1
        %v716 = vpop.permute.xlu0 %715
        %717 = vrot.lane.b32.xlu0 %v656, 1
        %v718 = vpop.permute.xlu0 %717
        %vm719 = vcmask 7168
        %v720 = vsel %vm719, %v716, %v718
        %v723 = vsel %vm719, 0.0, %v716
        %v724 = vmul.f32 %v723, %v675
        %v725 = vmul.f32 %v720, %v679
        %726 = vrot.lane.b32.xlu0 %v655, 127
        %v727 = vpop.permute.xlu0 %726
        %728 = vrot.lane.b32.xlu0 %v656, 127
        %v729 = vpop.permute.xlu0 %728
        %vm730 = vcmask 1039360
        %v731 = vsel %vm730, %v727, %v729
        %v734 = vsel %vm730, %v729, 0.0
        %v735 = vmul.f32 %v731, %v706
        %v736 = vmul.f32 %v734, %v710
        %737 = vrot.lane.b32.xlu0 %v655, 113
        %v738 = vpop.permute.xlu0 %737
        %739 = vrot.lane.b32.xlu0 %v656, 113
        %v740 = vpop.permute.xlu0 %739
        %vm741 = vcmask 924672
        %v742 = vsel %vm741, %v738, %v740
        %v745 = vsel %vm741, %v740, 0.0
        %v746 = vmul.f32 %v742, %v675
        %v747 = vmul.f32 %v745, %v679
        %748 = vrot.lane.b32.xlu0 %v655, 112
        %v749 = vpop.permute.xlu0 %748
        %750 = vrot.lane.b32.xlu0 %v656, 112
        %v751 = vpop.permute.xlu0 %750
        %vm752 = vcmask 916480
        %v753 = vsel %vm752, %v749, %v751
        %v756 = vsel %vm752, %v751, 0.0
        %757 = vrot.lane.b32.xlu0 %v655, 111
        %v758 = vpop.permute.xlu0 %757
        %759 = vrot.lane.b32.xlu0 %v656, 111
        %v760 = vpop.permute.xlu0 %759
        %vm761 = vcmask 908288
        %v762 = vsel %vm761, %v758, %v760
        %v765 = vsel %vm761, %v760, 0.0
        %v766 = vmul.f32 %v762, %v706
        %v767 = vmul.f32 %v765, %v710
        %vm768 = vcmask 588800
        %v770 = vsel %vm768, %v659, 0
        %772 = vmatprep.subr.mxu0 %v683
        %773 = vmatpush1.msra.mxu0 %v682
        %774 = vmatprep.subr.mxu0 %v689
        %775 = vmatpush1.msra.mxu0 %v692
        %776 = vmatprep.subr.mxu0 %v714
        %777 = vmatpush1.msra.mxu0 %v713
        %778 = vmatprep.subr.mxu0 %v725
        %779 = vmatpush1.msra.mxu0 %v724
        %780 = vmatprep.subr.mxu0 %v656
        %781 = vmatpush1.msra.mxu0 %v655
        %782 = vmatprep.subr.mxu0 %v736
        %783 = vmatpush1.msra.mxu0 %v735
        %784 = vmatprep.subr.mxu0 %v747
        %785 = vmatpush1.msra.mxu0 %v746
        %786 = vmatprep.subr.mxu0 %v756
        %787 = vmatpush1.msra.mxu0 %v753
        %788 = vmatprep.subr.mxu0 %v767
        %789 = vmatpush1.msra.mxu0 %v766
        %790 = vmatprep.subr.mxu0 0.0
        %791 = vmatpush1.msra.mxu0 0.0
        %792 = vmatprep.subr.mxu0 0.0
        %793 = vmatpush1.msra.mxu0 0.0
        %794 = vmatprep.subr.mxu0 0.0
        %795 = vmatpush1.msra.mxu0 0.0
        %796 = vmatprep.subr.mxu0 0.0
        %797 = vmatpush1.msra.mxu0 0.0
        %798 = vmatprep.subr.mxu0 0.0
        %799 = vmatpush1.msra.mxu0 0.0
        %800 = vmatprep.subr.mxu0 0.0
        %801 = vmatpush1.msra.mxu0 0.0
        %802 = vmatprep.subr.mxu0 0.0
        %803 = vmatpush1.msra.mxu0 0.0
        %804 = vmatprep.subr.mxu0 0.0
        %805 = vmatpush1.msra.mxu0 0.0
        %806 = vmatprep.subr.mxu0 0.0
        %807 = vmatpush1.msra.mxu0 0.0
        %808 = vmatprep.subr.mxu0 0.0
        %809 = vmatpush1.msra.mxu0 0.0
        %810 = vmatprep.subr.mxu0 0.0
        %811 = vmatpush1.msra.mxu0 0.0
        %812 = vmatprep.subr.mxu0 0.0
        %813 = vmatpush1.msra.mxu0 0.0
        %814 = vmatprep.subr.mxu0 0.0
        %815 = vmatpush1.msra.mxu0 0.0
        %816 = vmatprep.subr.mxu0 0.0
        %817 = vmatpush1.msra.mxu0 0.0
        %818 = vmatprep.subr.mxu0 0.0
        %819 = vmatpush1.msra.mxu0 0.0
        %820 = vmatprep.subr.mxu0 0.0
        %821 = vmatpush1.msra.mxu0 0.0
        %822 = vmatprep.subr.mxu0 0.0
        %823 = vmatpush1.msra.mxu0 0.0
        %824 = vmatprep.subr.mxu0 0.0
        %825 = vmatpush1.msra.mxu0 0.0
        %826 = vmatprep.subr.mxu0 0.0
        %827 = vmatpush1.msra.mxu0 0.0
        %828 = vmatprep.subr.mxu0 0.0
        %829 = vmatpush1.msra.mxu0 0.0
        %830 = vmatprep.subr.mxu0 0.0
        %831 = vmatpush1.msra.mxu0 0.0
        %832 = vmatprep.subr.mxu0 0.0
        %833 = vmatpush1.msra.mxu0 0.0
        %834 = vmatprep.subr.mxu0 0.0
        %835 = vmatpush1.msra.mxu0 0.0
        %836 = vmatprep.mubr.f32.mxu0 0.0
        %837 = vmatmul.mubr.f32.gmra.mrb[0].mxu0 %v770
        %v838 = vpop.f32.mrb[0].mxu0
        %v839 = vadd.f32 0.0, %v838
        %v840 = vpop.f32.mrb[0].mxu0
        %v841 = vadd.f32 0.0, %v840
        %842 = vdwg.mxu0
        %v843 = vld [vmem:[%s2] sm:$0xff]
        %845 = vset.pattern.permute.xlu0 0
        %846 = vperm.xlu0 %845, %v843
        %v847 = vpop.permute.xlu0 %846
        %v849 = vmul.f32 %v839, %v847
        %v850 = vmul.f32 %v841, %v847
        %v851 = vld [vmem:[%s3] sm:$0xff]
        %853 = vset.pattern.permute.xlu0 0
        %854 = vperm.xlu0 %853, %v851
        %v855 = vpop.permute.xlu0 %854
        %v857 = vadd.f32 %v849, %v855
        %v858 = vadd.f32 %v850, %v855
        %v859 = vmax.f32 %v857, 0.0
        %v860 = vmax.f32 %v858, 0.0
        %v861 = vld [vmem:[%s4] sm:$0xff]
        %864 = vrot.lane.b32.xlu0 %v859, 17
        %v865 = vpop.permute.xlu0 %864
        %866 = vrot.lane.b32.xlu0 %v860, 17
        %v867 = vpop.permute.xlu0 %866
        %v868 = vsel %vm666, %v865, %v867
        %v871 = vsel %vm666, 0.0, %v865
        %v872 = vmul.f32 %v871, %v675
        %v873 = vmul.f32 %v868, %v679
        %874 = vrot.lane.b32.xlu0 %v859, 16
        %v875 = vpop.permute.xlu0 %874
        %876 = vrot.lane.b32.xlu0 %v860, 16
        %v877 = vpop.permute.xlu0 %876
        %v878 = vsel %vm688, %v875, %v877
        %v881 = vsel %vm688, 0.0, %v875
        %882 = vrot.lane.b32.xlu0 %v859, 15
        %v883 = vpop.permute.xlu0 %882
        %884 = vrot.lane.b32.xlu0 %v860, 15
        %v885 = vpop.permute.xlu0 %884
        %v886 = vsel %vm697, %v883, %v885
        %v889 = vsel %vm697, 0.0, %v883
        %v890 = vmul.f32 %v889, %v706
        %v891 = vmul.f32 %v886, %v710
        %892 = vrot.lane.b32.xlu0 %v859, 1
        %v893 = vpop.permute.xlu0 %892
        %894 = vrot.lane.b32.xlu0 %v860, 1
        %v895 = vpop.permute.xlu0 %894
        %v896 = vsel %vm719, %v893, %v895
        %v899 = vsel %vm719, 0.0, %v893
        %v900 = vmul.f32 %v899, %v675
        %v901 = vmul.f32 %v896, %v679
        %902 = vrot.lane.b32.xlu0 %v859, 127
        %v903 = vpop.permute.xlu0 %902
        %904 = vrot.lane.b32.xlu0 %v860, 127
        %v905 = vpop.permute.xlu0 %904
        %v906 = vsel %vm730, %v903, %v905
        %v909 = vsel %vm730, %v905, 0.0
        %v910 = vmul.f32 %v906, %v706
        %v911 = vmul.f32 %v909, %v710
        %912 = vrot.lane.b32.xlu0 %v859, 113
        %v913 = vpop.permute.xlu0 %912
        %914 = vrot.lane.b32.xlu0 %v860, 113
        %v915 = vpop.permute.xlu0 %914
        %v916 = vsel %vm741, %v913, %v915
        %v919 = vsel %vm741, %v915, 0.0
        %v920 = vmul.f32 %v916, %v675
        %v921 = vmul.f32 %v919, %v679
        %922 = vrot.lane.b32.xlu0 %v859, 112
        %v923 = vpop.permute.xlu0 %922
        %924 = vrot.lane.b32.xlu0 %v860, 112
        %v925 = vpop.permute.xlu0 %924
        %v926 = vsel %vm752, %v923, %v925
        %v929 = vsel %vm752, %v925, 0.0
        %930 = vrot.lane.b32.xlu0 %v859, 111
        %v931 = vpop.permute.xlu0 %930
        %932 = vrot.lane.b32.xlu0 %v860, 111
        %v933 = vpop.permute.xlu0 %932
        %v934 = vsel %vm761, %v931, %v933
        %v937 = vsel %vm761, %v933, 0.0
        %v938 = vmul.f32 %v934, %v706
        %v939 = vmul.f32 %v937, %v710
        %v941 = vsel %vm768, %v861, 0
        %943 = vmatprep.subr.mxu0 %v873
        %944 = vmatpush1.msra.mxu0 %v872
        %945 = vmatprep.subr.mxu0 %v878
        %946 = vmatpush1.msra.mxu0 %v881
        %947 = vmatprep.subr.mxu0 %v891
        %948 = vmatpush1.msra.mxu0 %v890
        %949 = vmatprep.subr.mxu0 %v901
        %950 = vmatpush1.msra.mxu0 %v900
        %951 = vmatprep.subr.mxu0 %v860
        %952 = vmatpush1.msra.mxu0 %v859
        %953 = vmatprep.subr.mxu0 %v911
        %954 = vmatpush1.msra.mxu0 %v910
        %955 = vmatprep.subr.mxu0 %v921
        %956 = vmatpush1.msra.mxu0 %v920
        %957 = vmatprep.subr.mxu0 %v929
        %958 = vmatpush1.msra.mxu0 %v926
        %959 = vmatprep.subr.mxu0 %v939
        %960 = vmatpush1.msra.mxu0 %v938
        %961 = vmatprep.subr.mxu0 0.0
        %962 = vmatpush1.msra.mxu0 0.0
        %963 = vmatprep.subr.mxu0 0.0
        %964 = vmatpush1.msra.mxu0 0.0
        %965 = vmatprep.subr.mxu0 0.0
        %966 = vmatpush1.msra.mxu0 0.0
        %967 = vmatprep.subr.mxu0 0.0
        %968 = vmatpush1.msra.mxu0 0.0
        %969 = vmatprep.subr.mxu0 0.0
        %970 = vmatpush1.msra.mxu0 0.0
        %971 = vmatprep.subr.mxu0 0.0
        %972 = vmatpush1.msra.mxu0 0.0
        %973 = vmatprep.subr.mxu0 0.0
        %974 = vmatpush1.msra.mxu0 0.0
        %975 = vmatprep.subr.mxu0 0.0
        %976 = vmatpush1.msra.mxu0 0.0
        %977 = vmatprep.subr.mxu0 0.0
        %978 = vmatpush1.msra.mxu0 0.0
        %979 = vmatprep.subr.mxu0 0.0
        %980 = vmatpush1.msra.mxu0 0.0
        %981 = vmatprep.subr.mxu0 0.0
        %982 = vmatpush1.msra.mxu0 0.0
        %983 = vmatprep.subr.mxu0 0.0
        %984 = vmatpush1.msra.mxu0 0.0
        %985 = vmatprep.subr.mxu0 0.0
        %986 = vmatpush1.msra.mxu0 0.0
        %987 = vmatprep.subr.mxu0 0.0
        %988 = vmatpush1.msra.mxu0 0.0
        %989 = vmatprep.subr.mxu0 0.0
        %990 = vmatpush1.msra.mxu0 0.0
        %991 = vmatprep.subr.mxu0 0.0
        %992 = vmatpush1.msra.mxu0 0.0
        %993 = vmatprep.subr.mxu0 0.0
        %994 = vmatpush1.msra.mxu0 0.0
        %995 = vmatprep.subr.mxu0 0.0
        %996 = vmatpush1.msra.mxu0 0.0
        %997 = vmatprep.subr.mxu0 0.0
        %998 = vmatpush1.msra.mxu0 0.0
        %999 = vmatprep.subr.mxu0 0.0
        %1000 = vmatpush1.msra.mxu0 0.0
        %1001 = vmatprep.subr.mxu0 0.0
        %1002 = vmatpush1.msra.mxu0 0.0
        %1003 = vmatprep.subr.mxu0 0.0
        %1004 = vmatpush1.msra.mxu0 0.0
        %1005 = vmatprep.subr.mxu0 0.0
        %1006 = vmatpush1.msra.mxu0 0.0
        %1007 = vmatprep.mubr.f32.mxu0 0.0
        %1008 = vmatmul.mubr.f32.gmra.mrb[0].mxu0 %v941
        %v1009 = vpop.f32.mrb[0].mxu0
        %v1010 = vadd.f32 0.0, %v1009
        %v1011 = vpop.f32.mrb[0].mxu0
        %v1012 = vadd.f32 0.0, %v1011
        %1013 = vdwg.mxu0
        %v1014 = vld [vmem:[%s5] sm:$0xff]
        %1016 = vset.pattern.permute.xlu0 0
        %1017 = vperm.xlu0 %1016, %v1014
        %v1018 = vpop.permute.xlu0 %1017
        %v1020 = vmul.f32 %v1010, %v1018
        %v1021 = vmul.f32 %v1012, %v1018
        %v1022 = vld [vmem:[%s6] sm:$0xff]
        %1024 = vset.pattern.permute.xlu0 0
        %1025 = vperm.xlu0 %1024, %v1022
        %v1026 = vpop.permute.xlu0 %1025
        %v1028 = vadd.f32 %v1020, %v1026
        %v1029 = vadd.f32 %v1021, %v1026
        %v1030 = vld [vmem:[%s15] sm:$0xff]
        %v1031 = vld [vmem:[%s15 + $0x8] sm:$0xff]
        %v1032 = vld [vmem:[%s15 + $0x10] sm:$0xff]
        %v1033 = vld [vmem:[%s15 + $0x18] sm:$0xff]
        %v1034 = vld [vmem:[%s15 + $0x20] sm:$0xff]
        %v1035 = vld [vmem:[%s15 + $0x28] sm:$0xff]
        %v1036 = vld [vmem:[%s15 + $0x30] sm:$0xff]
        %v1037 = vld [vmem:[%s15 + $0x38] sm:$0xff]
        %v1038 = vld [vmem:[%s15 + $0x40] sm:$0xff]
        %v1039 = vld [vmem:[%s15 + $0x48] sm:$0xff]
        %v1040 = vld [vmem:[%s15 + $0x50] sm:$0xff]
        %v1041 = vld [vmem:[%s15 + $0x58] sm:$0xff]
        %v1042 = vld [vmem:[%s15 + $0x60] sm:$0xff]
        %v1043 = vld [vmem:[%s15 + $0x68] sm:$0xff]
        %v1044 = vld [vmem:[%s15 + $0x70] sm:$0xff]
        %v1045 = vld [vmem:[%s15 + $0x78] sm:$0xff]
        %v1046 = vld [vmem:[%s15 + $0x80] sm:$0xff]
        %v1047 = vld [vmem:[%s15 + $0x88] sm:$0xff]
        %v1048 = vld [vmem:[%s15 + $0x90] sm:$0xff]
        %v1049 = vld [vmem:[%s15 + $0x98] sm:$0xff]
        %v1050 = vld [vmem:[%s15 + $0xa0] sm:$0xff]
        %v1051 = vld [vmem:[%s15 + $0xa8] sm:$0xff]
        %v1052 = vld [vmem:[%s15 + $0xb0] sm:$0xff]
        %v1053 = vld [vmem:[%s15 + $0xb8] sm:$0xff]
        %v1054 = vld [vmem:[%s15 + $0xc0] sm:$0xff]
        %v1055 = vld [vmem:[%s15 + $0xc8] sm:$0xff]
        %v1056 = vld [vmem:[%s15 + $0xd0] sm:$0xff]
        %v1057 = vld [vmem:[%s15 + $0xd8] sm:$0xff]
        %v1058 = vld [vmem:[%s15 + $0xe0] sm:$0xff]
        %v1059 = vld [vmem:[%s15 + $0xe8] sm:$0xff]
        %v1060 = vld [vmem:[%s15 + $0xf0] sm:$0xff]
        %v1061 = vld [vmem:[%s15 + $0xf8] sm:$0xff]
        %1062 = vmatprep.subr.mxu0 0.0
        %1063 = vmatpush1.msra.mxu0 %v1030
        %1064 = vmatprep.subr.mxu0 0.0
        %1065 = vmatpush1.msra.mxu0 %v1031
        %1066 = vmatprep.subr.mxu0 0.0
        %1067 = vmatpush1.msra.mxu0 %v1032
        %1068 = vmatprep.subr.mxu0 0.0
        %1069 = vmatpush1.msra.mxu0 %v1033
        %1070 = vmatprep.subr.mxu0 0.0
        %1071 = vmatpush1.msra.mxu0 %v1034
        %1072 = vmatprep.subr.mxu0 0.0
        %1073 = vmatpush1.msra.mxu0 %v1035
        %1074 = vmatprep.subr.mxu0 0.0
        %1075 = vmatpush1.msra.mxu0 %v1036
        %1076 = vmatprep.subr.mxu0 0.0
        %1077 = vmatpush1.msra.mxu0 %v1037
        %1078 = vmatprep.subr.mxu0 0.0
        %1079 = vmatpush1.msra.mxu0 %v1038
        %1080 = vmatprep.subr.mxu0 0.0
        %1081 = vmatpush1.msra.mxu0 %v1039
        %1082 = vmatprep.subr.mxu0 0.0
        %1083 = vmatpush1.msra.mxu0 %v1040
        %1084 = vmatprep.subr.mxu0 0.0
        %1085 = vmatpush1.msra.mxu0 %v1041
        %1086 = vmatprep.subr.mxu0 0.0
        %1087 = vmatpush1.msra.mxu0 %v1042
        %1088 = vmatprep.subr.mxu0 0.0
        %1089 = vmatpush1.msra.mxu0 %v1043
        %1090 = vmatprep.subr.mxu0 0.0
        %1091 = vmatpush1.msra.mxu0 %v1044
        %1092 = vmatprep.subr.mxu0 0.0
        %1093 = vmatpush1.msra.mxu0 %v1045
        %1094 = vmatprep.subr.mxu0 0.0
        %1095 = vmatpush1.msra.mxu0 %v1046
        %1096 = vmatprep.subr.mxu0 0.0
        %1097 = vmatpush1.msra.mxu0 %v1047
        %1098 = vmatprep.subr.mxu0 0.0
        %1099 = vmatpush1.msra.mxu0 %v1048
        %1100 = vmatprep.subr.mxu0 0.0
        %1101 = vmatpush1.msra.mxu0 %v1049
        %1102 = vmatprep.subr.mxu0 0.0
        %1103 = vmatpush1.msra.mxu0 %v1050
        %1104 = vmatprep.subr.mxu0 0.0
        %1105 = vmatpush1.msra.mxu0 %v1051
        %1106 = vmatprep.subr.mxu0 0.0
        %1107 = vmatpush1.msra.mxu0 %v1052
        %1108 = vmatprep.subr.mxu0 0.0
        %1109 = vmatpush1.msra.mxu0 %v1053
        %1110 = vmatprep.subr.mxu0 0.0
        %1111 = vmatpush1.msra.mxu0 %v1054
        %1112 = vmatprep.subr.mxu0 0.0
        %1113 = vmatpush1.msra.mxu0 %v1055
        %1114 = vmatprep.subr.mxu0 0.0
        %1115 = vmatpush1.msra.mxu0 %v1056
        %1116 = vmatprep.subr.mxu0 0.0
        %1117 = vmatpush1.msra.mxu0 %v1057
        %1118 = vmatprep.subr.mxu0 0.0
        %1119 = vmatpush1.msra.mxu0 %v1058
        %1120 = vmatprep.subr.mxu0 0.0
        %1121 = vmatpush1.msra.mxu0 %v1059
        %1122 = vmatprep.subr.mxu0 0.0
        %1123 = vmatpush1.msra.mxu0 %v1060
        %1124 = vmatprep.subr.mxu0 0.0
        %1125 = vmatpush1.msra.mxu0 %v1061
        %1126 = vmatprep.mubr.f32.mxu0 %v860
        %1127 = vmatmul.mubr.f32.gmra.mrb[0].mxu0 %v859
        %v1128 = vpop.f32.mrb[0].mxu0
        %v1129 = vadd.f32 0.0, %v1128
        %v1130 = vpop.f32.mrb[0].mxu0
        %1131 = vdwg.mxu0
        %v1132 = vld [vmem:[%s16] sm:$0xff]
        %v1133 = vld [vmem:[%s16 + $0x8] sm:$0xff]
        %v1134 = vld [vmem:[%s16 + $0x10] sm:$0xff]
        %v1135 = vld [vmem:[%s16 + $0x18] sm:$0xff]
        %v1136 = vld [vmem:[%s16 + $0x20] sm:$0xff]
        %v1137 = vld [vmem:[%s16 + $0x28] sm:$0xff]
        %v1138 = vld [vmem:[%s16 + $0x30] sm:$0xff]
        %v1139 = vld [vmem:[%s16 + $0x38] sm:$0xff]
        %v1140 = vld [vmem:[%s16 + $0x40] sm:$0xff]
        %v1141 = vld [vmem:[%s16 + $0x48] sm:$0xff]
        %v1142 = vld [vmem:[%s16 + $0x50] sm:$0xff]
        %v1143 = vld [vmem:[%s16 + $0x58] sm:$0xff]
        %v1144 = vld [vmem:[%s16 + $0x60] sm:$0xff]
        %v1145 = vld [vmem:[%s16 + $0x68] sm:$0xff]
        %v1146 = vld [vmem:[%s16 + $0x70] sm:$0xff]
        %v1147 = vld [vmem:[%s16 + $0x78] sm:$0xff]
        %v1148 = vld [vmem:[%s16 + $0x80] sm:$0xff]
        %v1149 = vld [vmem:[%s16 + $0x88] sm:$0xff]
        %v1150 = vld [vmem:[%s16 + $0x90] sm:$0xff]
        %v1151 = vld [vmem:[%s16 + $0x98] sm:$0xff]
        %v1152 = vld [vmem:[%s16 + $0xa0] sm:$0xff]
        %v1153 = vld [vmem:[%s16 + $0xa8] sm:$0xff]
        %v1154 = vld [vmem:[%s16 + $0xb0] sm:$0xff]
        %v1155 = vld [vmem:[%s16 + $0xb8] sm:$0xff]
        %v1156 = vld [vmem:[%s16 + $0xc0] sm:$0xff]
        %v1157 = vld [vmem:[%s16 + $0xc8] sm:$0xff]
        %v1158 = vld [vmem:[%s16 + $0xd0] sm:$0xff]
        %v1159 = vld [vmem:[%s16 + $0xd8] sm:$0xff]
        %v1160 = vld [vmem:[%s16 + $0xe0] sm:$0xff]
        %v1161 = vld [vmem:[%s16 + $0xe8] sm:$0xff]
        %v1162 = vld [vmem:[%s16 + $0xf0] sm:$0xff]
        %v1163 = vld [vmem:[%s16 + $0xf8] sm:$0xff]
        %1164 = vmatprep.subr.mxu0 0.0
        %1165 = vmatpush1.msra.mxu0 %v1132
        %1166 = vmatprep.subr.mxu0 0.0
        %1167 = vmatpush1.msra.mxu0 %v1133
        %1168 = vmatprep.subr.mxu0 0.0
        %1169 = vmatpush1.msra.mxu0 %v1134
        %1170 = vmatprep.subr.mxu0 0.0
        %1171 = vmatpush1.msra.mxu0 %v1135
        %1172 = vmatprep.subr.mxu0 0.0
        %1173 = vmatpush1.msra.mxu0 %v1136
        %1174 = vmatprep.subr.mxu0 0.0
        %1175 = vmatpush1.msra.mxu0 %v1137
        %1176 = vmatprep.subr.mxu0 0.0
        %1177 = vmatpush1.msra.mxu0 %v1138
        %1178 = vmatprep.subr.mxu0 0.0
        %1179 = vmatpush1.msra.mxu0 %v1139
        %1180 = vmatprep.subr.mxu0 0.0
        %1181 = vmatpush1.msra.mxu0 %v1140
        %1182 = vmatprep.subr.mxu0 0.0
        %1183 = vmatpush1.msra.mxu0 %v1141
        %1184 = vmatprep.subr.mxu0 0.0
        %1185 = vmatpush1.msra.mxu0 %v1142
        %1186 = vmatprep.subr.mxu0 0.0
        %1187 = vmatpush1.msra.mxu0 %v1143
        %1188 = vmatprep.subr.mxu0 0.0
        %1189 = vmatpush1.msra.mxu0 %v1144
        %1190 = vmatprep.subr.mxu0 0.0
        %1191 = vmatpush1.msra.mxu0 %v1145
        %1192 = vmatprep.subr.mxu0 0.0
        %1193 = vmatpush1.msra.mxu0 %v1146
        %1194 = vmatprep.subr.mxu0 0.0
        %1195 = vmatpush1.msra.mxu0 %v1147
        %1196 = vmatprep.subr.mxu0 0.0
        %1197 = vmatpush1.msra.mxu0 %v1148
        %1198 = vmatprep.subr.mxu0 0.0
        %1199 = vmatpush1.msra.mxu0 %v1149
        %1200 = vmatprep.subr.mxu0 0.0
        %1201 = vmatpush1.msra.mxu0 %v1150
        %1202 = vmatprep.subr.mxu0 0.0
        %1203 = vmatpush1.msra.mxu0 %v1151
        %1204 = vmatprep.subr.mxu0 0.0
        %1205 = vmatpush1.msra.mxu0 %v1152
        %1206 = vmatprep.subr.mxu0 0.0
        %1207 = vmatpush1.msra.mxu0 %v1153
        %1208 = vmatprep.subr.mxu0 0.0
        %1209 = vmatpush1.msra.mxu0 %v1154
        %1210 = vmatprep.subr.mxu0 0.0
        %1211 = vmatpush1.msra.mxu0 %v1155
        %1212 = vmatprep.subr.mxu0 0.0
        %1213 = vmatpush1.msra.mxu0 %v1156
        %1214 = vmatprep.subr.mxu0 0.0
        %1215 = vmatpush1.msra.mxu0 %v1157
        %1216 = vmatprep.subr.mxu0 0.0
        %1217 = vmatpush1.msra.mxu0 %v1158
        %1218 = vmatprep.subr.mxu0 0.0
        %1219 = vmatpush1.msra.mxu0 %v1159
        %1220 = vmatprep.subr.mxu0 0.0
        %1221 = vmatpush1.msra.mxu0 %v1160
        %1222 = vmatprep.subr.mxu0 0.0
        %1223 = vmatpush1.msra.mxu0 %v1161
        %1224 = vmatprep.subr.mxu0 0.0
        %1225 = vmatpush1.msra.mxu0 %v1162
        %1226 = vmatprep.subr.mxu0 0.0
        %1227 = vmatpush1.msra.mxu0 %v1163
        %1228 = vmatprep.mubr.f32.mxu0 %v860
        %1229 = vmatmul.mubr.f32.gmra.mrb[0].mxu0 %v859
        %v1230 = vpop.f32.mrb[0].mxu0
        %v1231 = vadd.f32 0.0, %v1230
        %v1232 = vpop.f32.mrb[0].mxu0
        %1233 = vdwg.mxu0
        %1235 = vrot.lane.b32.xlu0 %v1129, 1
        %v1236 = vpop.permute.xlu0 %1235
        %v1238 = vsel %vm719, 0.0, %v1236
        %1239 = vrot.lane.b32.xlu0 %v1129, 127
        %v1240 = vpop.permute.xlu0 %1239
        %v1242 = vsel %vm697, %v1240, 0.0
        %v1243 = vld [vmem:[%s7] sm:$0xff]
        %v1244 = vld [vmem:[%s8] sm:$0xff]
        %1246 = vset.pattern.permute.xlu0 0
        %1247 = vperm.xlu0 %1246, %v1244
        %v1248 = vpop.permute.xlu0 %1247
        %vm1250 = vcmask 195584
        %v1252 = vsel %vm1250, %v1243, 0
        %1254 = vmatprep.subr.mxu0 0.0
        %1255 = vmatpush1.msra.mxu0 %v1238
        %1256 = vmatprep.subr.mxu0 0.0
        %1257 = vmatpush1.msra.mxu0 %v1129
        %1258 = vmatprep.subr.mxu0 0.0
        %1259 = vmatpush1.msra.mxu0 %v1242
        %1260 = vmatprep.subr.mxu0 0.0
        %1261 = vmatpush1.msra.mxu0 0.0
        %1262 = vmatprep.subr.mxu0 0.0
        %1263 = vmatpush1.msra.mxu0 0.0
        %1264 = vmatprep.subr.mxu0 0.0
        %1265 = vmatpush1.msra.mxu0 0.0
        %1266 = vmatprep.subr.mxu0 0.0
        %1267 = vmatpush1.msra.mxu0 0.0
        %1268 = vmatprep.subr.mxu0 0.0
        %1269 = vmatpush1.msra.mxu0 0.0
        %1270 = vmatprep.subr.mxu0 0.0
        %1271 = vmatpush1.msra.mxu0 0.0
        %1272 = vmatprep.subr.mxu0 0.0
        %1273 = vmatpush1.msra.mxu0 0.0
        %1274 = vmatprep.subr.mxu0 0.0
        %1275 = vmatpush1.msra.mxu0 0.0
        %1276 = vmatprep.subr.mxu0 0.0
        %1277 = vmatpush1.msra.mxu0 0.0
        %1278 = vmatprep.subr.mxu0 0.0
        %1279 = vmatpush1.msra.mxu0 0.0
        %1280 = vmatprep.subr.mxu0 0.0
        %1281 = vmatpush1.msra.mxu0 0.0
        %1282 = vmatprep.subr.mxu0 0.0
        %1283 = vmatpush1.msra.mxu0 0.0
        %1284 = vmatprep.subr.mxu0 0.0
        %1285 = vmatpush1.msra.mxu0 0.0
        %1286 = vmatprep.subr.mxu0 0.0
        %1287 = vmatpush1.msra.mxu0 0.0
        %1288 = vmatprep.subr.mxu0 0.0
        %1289 = vmatpush1.msra.mxu0 0.0
        %1290 = vmatprep.subr.mxu0 0.0
        %1291 = vmatpush1.msra.mxu0 0.0
        %1292 = vmatprep.subr.mxu0 0.0
        %1293 = vmatpush1.msra.mxu0 0.0
        %1294 = vmatprep.subr.mxu0 0.0
        %1295 = vmatpush1.msra.mxu0 0.0
        %1296 = vmatprep.subr.mxu0 0.0
        %1297 = vmatpush1.msra.mxu0 0.0
        %1298 = vmatprep.subr.mxu0 0.0
        %1299 = vmatpush1.msra.mxu0 0.0
        %1300 = vmatprep.subr.mxu0 0.0
        %1301 = vmatpush1.msra.mxu0 0.0
        %1302 = vmatprep.subr.mxu0 0.0
        %1303 = vmatpush1.msra.mxu0 0.0
        %1304 = vmatprep.subr.mxu0 0.0
        %1305 = vmatpush1.msra.mxu0 0.0
        %1306 = vmatprep.subr.mxu0 0.0
        %1307 = vmatpush1.msra.mxu0 0.0
        %1308 = vmatprep.subr.mxu0 0.0
        %1309 = vmatpush1.msra.mxu0 0.0
        %1310 = vmatprep.subr.mxu0 0.0
        %1311 = vmatpush1.msra.mxu0 0.0
        %1312 = vmatprep.subr.mxu0 0.0
        %1313 = vmatpush1.msra.mxu0 0.0
        %1314 = vmatprep.subr.mxu0 0.0
        %1315 = vmatpush1.msra.mxu0 0.0
        %1316 = vmatprep.subr.mxu0 0.0
        %1317 = vmatpush1.msra.mxu0 0.0
        %1318 = vmatprep.mubr.f32.mxu0 0.0
        %1319 = vmatmul.mubr.f32.gmra.mrb[0].mxu0 %v1252
        %v1320 = vpop.f32.mrb[0].mxu0
        %v1321 = vadd.f32 %v1248, %v1320
        %v1322 = vpop.f32.mrb[0].mxu0
        %1323 = vdwg.mxu0
        %v1324 = vmax.f32 %v1321, 0.0
        %1326 = vrot.lane.b32.xlu0 %v1324, 1
        %v1327 = vpop.permute.xlu0 %1326
        %v1329 = vsel %vm719, 0.0, %v1327
        %1330 = vrot.lane.b32.xlu0 %v1324, 127
        %v1331 = vpop.permute.xlu0 %1330
        %v1333 = vsel %vm697, %v1331, 0.0
        %v1334 = vld [vmem:[%s9] sm:$0xff]
        %v1335 = vld [vmem:[%s10] sm:$0xff]
        %1337 = vset.pattern.permute.xlu0 0
        %1338 = vperm.xlu0 %1337, %v1335
        %v1339 = vpop.permute.xlu0 %1338
        %v1342 = vsel %vm1250, %v1334, 0
        %1344 = vmatprep.subr.mxu0 0.0
        %1345 = vmatpush1.msra.mxu0 %v1329
        %1346 = vmatprep.subr.mxu0 0.0
        %1347 = vmatpush1.msra.mxu0 %v1324
        %1348 = vmatprep.subr.mxu0 0.0
        %1349 = vmatpush1.msra.mxu0 %v1333
        %1350 = vmatprep.subr.mxu0 0.0
        %1351 = vmatpush1.msra.mxu0 0.0
        %1352 = vmatprep.subr.mxu0 0.0
        %1353 = vmatpush1.msra.mxu0 0.0
        %1354 = vmatprep.subr.mxu0 0.0
        %1355 = vmatpush1.msra.mxu0 0.0
        %1356 = vmatprep.subr.mxu0 0.0
        %1357 = vmatpush1.msra.mxu0 0.0
        %1358 = vmatprep.subr.mxu0 0.0
        %1359 = vmatpush1.msra.mxu0 0.0
        %1360 = vmatprep.subr.mxu0 0.0
        %1361 = vmatpush1.msra.mxu0 0.0
        %1362 = vmatprep.subr.mxu0 0.0
        %1363 = vmatpush1.msra.mxu0 0.0
        %1364 = vmatprep.subr.mxu0 0.0
        %1365 = vmatpush1.msra.mxu0 0.0
        %1366 = vmatprep.subr.mxu0 0.0
        %1367 = vmatpush1.msra.mxu0 0.0
        %1368 = vmatprep.subr.mxu0 0.0
        %1369 = vmatpush1.msra.mxu0 0.0
        %1370 = vmatprep.subr.mxu0 0.0
        %1371 = vmatpush1.msra.mxu0 0.0
        %1372 = vmatprep.subr.mxu0 0.0
        %1373 = vmatpush1.msra.mxu0 0.0
        %1374 = vmatprep.subr.mxu0 0.0
        %1375 = vmatpush1.msra.mxu0 0.0
        %1376 = vmatprep.subr.mxu0 0.0
        %1377 = vmatpush1.msra.mxu0 0.0
        %1378 = vmatprep.subr.mxu0 0.0
        %1379 = vmatpush1.msra.mxu0 0.0
        %1380 = vmatprep.subr.mxu0 0.0
        %1381 = vmatpush1.msra.mxu0 0.0
        %1382 = vmatprep.subr.mxu0 0.0
        %1383 = vmatpush1.msra.mxu0 0.0
        %1384 = vmatprep.subr.mxu0 0.0
        %1385 = vmatpush1.msra.mxu0 0.0
        %1386 = vmatprep.subr.mxu0 0.0
        %1387 = vmatpush1.msra.mxu0 0.0
        %1388 = vmatprep.subr.mxu0 0.0
        %1389 = vmatpush1.msra.mxu0 0.0
        %1390 = vmatprep.subr.mxu0 0.0
        %1391 = vmatpush1.msra.mxu0 0.0
        %1392 = vmatprep.subr.mxu0 0.0
        %1393 = vmatpush1.msra.mxu0 0.0
        %1394 = vmatprep.subr.mxu0 0.0
        %1395 = vmatpush1.msra.mxu0 0.0
        %1396 = vmatprep.subr.mxu0 0.0
        %1397 = vmatpush1.msra.mxu0 0.0
        %1398 = vmatprep.subr.mxu0 0.0
        %1399 = vmatpush1.msra.mxu0 0.0
        %1400 = vmatprep.subr.mxu0 0.0
        %1401 = vmatpush1.msra.mxu0 0.0
        %1402 = vmatprep.subr.mxu0 0.0
        %1403 = vmatpush1.msra.mxu0 0.0
        %1404 = vmatprep.subr.mxu0 0.0
        %1405 = vmatpush1.msra.mxu0 0.0
        %1406 = vmatprep.subr.mxu0 0.0
        %1407 = vmatpush1.msra.mxu0 0.0
        %1408 = vmatprep.mubr.f32.mxu0 0.0
        %1409 = vmatmul.mubr.f32.gmra.mrb[0].mxu0 %v1342
        %v1410 = vpop.f32.mrb[0].mxu0
        %v1411 = vadd.f32 %v1339, %v1410
        %v1412 = vpop.f32.mrb[0].mxu0
        %1413 = vdwg.mxu0
        %v1414 = vsub.f32 0.0, %v1411
        %v1415 = vmul.f32 %v1414, 1.442695
        %v1416 = vpow.pop %v1415
        %v1417 = vadd.f32 %v1416, 1.0
        %v1418 = vrcp.pop %v1417
        %1420 = vrot.lane.b32.xlu0 %v1231, 1
        %v1421 = vpop.permute.xlu0 %1420
        %v1423 = vsel %vm719, 0.0, %v1421
        %1424 = vrot.lane.b32.xlu0 %v1231, 127
        %v1425 = vpop.permute.xlu0 %1424
        %v1427 = vsel %vm697, %v1425, 0.0
        %v1428 = vld [vmem:[%s11] sm:$0xff]
        %v1429 = vld [vmem:[%s12] sm:$0xff]
        %1431 = vset.pattern.permute.xlu0 0
        %1432 = vperm.xlu0 %1431, %v1429
        %v1433 = vpop.permute.xlu0 %1432
        %v1436 = vsel %vm1250, %v1428, 0
        %1438 = vmatprep.subr.mxu0 0.0
        %1439 = vmatpush1.msra.mxu0 %v1423
        %1440 = vmatprep.subr.mxu0 0.0
        %1441 = vmatpush1.msra.mxu0 %v1231
        %1442 = vmatprep.subr.mxu0 0.0
        %1443 = vmatpush1.msra.mxu0 %v1427
        %1444 = vmatprep.subr.mxu0 0.0
        %1445 = vmatpush1.msra.mxu0 0.0
        %1446 = vmatprep.subr.mxu0 0.0
        %1447 = vmatpush1.msra.mxu0 0.0
        %1448 = vmatprep.subr.mxu0 0.0
        %1449 = vmatpush1.msra.mxu0 0.0
        %1450 = vmatprep.subr.mxu0 0.0
        %1451 = vmatpush1.msra.mxu0 0.0
        %1452 = vmatprep.subr.mxu0 0.0
        %1453 = vmatpush1.msra.mxu0 0.0
        %1454 = vmatprep.subr.mxu0 0.0
        %1455 = vmatpush1.msra.mxu0 0.0
        %1456 = vmatprep.subr.mxu0 0.0
        %1457 = vmatpush1.msra.mxu0 0.0
        %1458 = vmatprep.subr.mxu0 0.0
        %1459 = vmatpush1.msra.mxu0 0.0
        %1460 = vmatprep.subr.mxu0 0.0
        %1461 = vmatpush1.msra.mxu0 0.0
        %1462 = vmatprep.subr.mxu0 0.0
        %1463 = vmatpush1.msra.mxu0 0.0
        %1464 = vmatprep.subr.mxu0 0.0
        %1465 = vmatpush1.msra.mxu0 0.0
        %1466 = vmatprep.subr.mxu0 0.0
        %1467 = vmatpush1.msra.mxu0 0.0
        %1468 = vmatprep.subr.mxu0 0.0
        %1469 = vmatpush1.msra.mxu0 0.0
        %1470 = vmatprep.subr.mxu0 0.0
        %1471 = vmatpush1.msra.mxu0 0.0
        %1472 = vmatprep.subr.mxu0 0.0
        %1473 = vmatpush1.msra.mxu0 0.0
        %1474 = vmatprep.subr.mxu0 0.0
        %1475 = vmatpush1.msra.mxu0 0.0
        %1476 = vmatprep.subr.mxu0 0.0
        %1477 = vmatpush1.msra.mxu0 0.0
        %1478 = vmatprep.subr.mxu0 0.0
        %1479 = vmatpush1.msra.mxu0 0.0
        %1480 = vmatprep.subr.mxu0 0.0
        %1481 = vmatpush1.msra.mxu0 0.0
        %1482 = vmatprep.subr.mxu0 0.0
        %1483 = vmatpush1.msra.mxu0 0.0
        %1484 = vmatprep.subr.mxu0 0.0
        %1485 = vmatpush1.msra.mxu0 0.0
        %1486 = vmatprep.subr.mxu0 0.0
        %1487 = vmatpush1.msra.mxu0 0.0
        %1488 = vmatprep.subr.mxu0 0.0
        %1489 = vmatpush1.msra.mxu0 0.0
        %1490 = vmatprep.subr.mxu0 0.0
        %1491 = vmatpush1.msra.mxu0 0.0
        %1492 = vmatprep.subr.mxu0 0.0
        %1493 = vmatpush1.msra.mxu0 0.0
        %1494 = vmatprep.subr.mxu0 0.0
        %1495 = vmatpush1.msra.mxu0 0.0
        %1496 = vmatprep.subr.mxu0 0.0
        %1497 = vmatpush1.msra.mxu0 0.0
        %1498 = vmatprep.subr.mxu0 0.0
        %1499 = vmatpush1.msra.mxu0 0.0
        %1500 = vmatprep.subr.mxu0 0.0
        %1501 = vmatpush1.msra.mxu0 0.0
        %1502 = vmatprep.mubr.f32.mxu0 0.0
        %1503 = vmatmul.mubr.f32.gmra.mrb[0].mxu0 %v1436
        %v1504 = vpop.f32.mrb[0].mxu0
        %v1505 = vadd.f32 %v1433, %v1504
        %v1506 = vpop.f32.mrb[0].mxu0
        %1507 = vdwg.mxu0
        %v1508 = vmax.f32 %v1505, 0.0
        %1510 = vrot.lane.b32.xlu0 %v1508, 1
        %v1511 = vpop.permute.xlu0 %1510
        %v1513 = vsel %vm719, 0.0, %v1511
        %1514 = vrot.lane.b32.xlu0 %v1508, 127
        %v1515 = vpop.permute.xlu0 %1514
        %v1517 = vsel %vm697, %v1515, 0.0
        %v1518 = vld [vmem:[%s13] sm:$0xff]
        %v1519 = vld [vmem:[%s14] sm:$0xff]
        %1521 = vset.pattern.permute.xlu0 0
        %1522 = vperm.xlu0 %1521, %v1519
        %v1523 = vpop.permute.xlu0 %1522
        %v1526 = vsel %vm1250, %v1518, 0
        %1528 = vmatprep.subr.mxu0 0.0
        %1529 = vmatpush1.msra.mxu0 %v1513
        %1530 = vmatprep.subr.mxu0 0.0
        %1531 = vmatpush1.msra.mxu0 %v1508
        %1532 = vmatprep.subr.mxu0 0.0
        %1533 = vmatpush1.msra.mxu0 %v1517
        %1534 = vmatprep.subr.mxu0 0.0
        %1535 = vmatpush1.msra.mxu0 0.0
        %1536 = vmatprep.subr.mxu0 0.0
        %1537 = vmatpush1.msra.mxu0 0.0
        %1538 = vmatprep.subr.mxu0 0.0
        %1539 = vmatpush1.msra.mxu0 0.0
        %1540 = vmatprep.subr.mxu0 0.0
        %1541 = vmatpush1.msra.mxu0 0.0
        %1542 = vmatprep.subr.mxu0 0.0
        %1543 = vmatpush1.msra.mxu0 0.0
        %1544 = vmatprep.subr.mxu0 0.0
        %1545 = vmatpush1.msra.mxu0 0.0
        %1546 = vmatprep.subr.mxu0 0.0
        %1547 = vmatpush1.msra.mxu0 0.0
        %1548 = vmatprep.subr.mxu0 0.0
        %1549 = vmatpush1.msra.mxu0 0.0
        %1550 = vmatprep.subr.mxu0 0.0
        %1551 = vmatpush1.msra.mxu0 0.0
        %1552 = vmatprep.subr.mxu0 0.0
        %1553 = vmatpush1.msra.mxu0 0.0
        %1554 = vmatprep.subr.mxu0 0.0
        %1555 = vmatpush1.msra.mxu0 0.0
        %1556 = vmatprep.subr.mxu0 0.0
        %1557 = vmatpush1.msra.mxu0 0.0
        %1558 = vmatprep.subr.mxu0 0.0
        %1559 = vmatpush1.msra.mxu0 0.0
        %1560 = vmatprep.subr.mxu0 0.0
        %1561 = vmatpush1.msra.mxu0 0.0
        %1562 = vmatprep.subr.mxu0 0.0
        %1563 = vmatpush1.msra.mxu0 0.0
        %1564 = vmatprep.subr.mxu0 0.0
        %1565 = vmatpush1.msra.mxu0 0.0
        %1566 = vmatprep.subr.mxu0 0.0
        %1567 = vmatpush1.msra.mxu0 0.0
        %1568 = vmatprep.subr.mxu0 0.0
        %1569 = vmatpush1.msra.mxu0 0.0
        %1570 = vmatprep.subr.mxu0 0.0
        %1571 = vmatpush1.msra.mxu0 0.0
        %1572 = vmatprep.subr.mxu0 0.0
        %1573 = vmatpush1.msra.mxu0 0.0
        %1574 = vmatprep.subr.mxu0 0.0
        %1575 = vmatpush1.msra.mxu0 0.0
        %1576 = vmatprep.subr.mxu0 0.0
        %1577 = vmatpush1.msra.mxu0 0.0
        %1578 = vmatprep.subr.mxu0 0.0
        %1579 = vmatpush1.msra.mxu0 0.0
        %1580 = vmatprep.subr.mxu0 0.0
        %1581 = vmatpush1.msra.mxu0 0.0
        %1582 = vmatprep.subr.mxu0 0.0
        %1583 = vmatpush1.msra.mxu0 0.0
        %1584 = vmatprep.subr.mxu0 0.0
        %1585 = vmatpush1.msra.mxu0 0.0
        %1586 = vmatprep.subr.mxu0 0.0
        %1587 = vmatpush1.msra.mxu0 0.0
        %1588 = vmatprep.subr.mxu0 0.0
        %1589 = vmatpush1.msra.mxu0 0.0
        %1590 = vmatprep.subr.mxu0 0.0
        %1591 = vmatpush1.msra.mxu0 0.0
        %1592 = vmatprep.mubr.f32.mxu0 0.0
        %1593 = vmatmul.mubr.f32.gmra.mrb[0].mxu0 %v1526
        %v1594 = vpop.f32.mrb[0].mxu0
        %v1595 = vadd.f32 %v1523, %v1594
        %v1596 = vpop.f32.mrb[0].mxu0
        %1597 = vdwg.mxu0
        %v1598 = vsub.f32 0.0, %v1595
        %v1599 = vmul.f32 %v1598, 1.442695
        %v1600 = vpow.pop %v1599
        %v1601 = vadd.f32 %v1600, 1.0
        %v1602 = vrcp.pop %v1601
        %v1603 = vld [vmem:[%s17] sm:$0xff]
        %v1604 = vld [vmem:[%s17 + $0x8] sm:$0xff]
        %v1605 = vld [vmem:[%s17 + $0x10] sm:$0xff]
        %v1606 = vld [vmem:[%s17 + $0x18] sm:$0xff]
        %v1608 = vsel %vm688, %v1418, 0
        %1610 = vmatprep.subr.mxu0 %v1604
        %1611 = vmatpush1.msra.mxu0 %v1603
        %1612 = vmatprep.subr.mxu0 %v1606
        %1613 = vmatpush1.msra.mxu0 %v1605
        %1614 = vmatprep.subr.mxu0 0.0
        %1615 = vmatpush1.msra.mxu0 0.0
        %1616 = vmatprep.subr.mxu0 0.0
        %1617 = vmatpush1.msra.mxu0 0.0
        %1618 = vmatprep.subr.mxu0 0.0
        %1619 = vmatpush1.msra.mxu0 0.0
        %1620 = vmatprep.subr.mxu0 0.0
        %1621 = vmatpush1.msra.mxu0 0.0
        %1622 = vmatprep.subr.mxu0 0.0
        %1623 = vmatpush1.msra.mxu0 0.0
        %1624 = vmatprep.subr.mxu0 0.0
        %1625 = vmatpush1.msra.mxu0 0.0
        %1626 = vmatprep.subr.mxu0 0.0
        %1627 = vmatpush1.msra.mxu0 0.0
        %1628 = vmatprep.subr.mxu0 0.0
        %1629 = vmatpush1.msra.mxu0 0.0
        %1630 = vmatprep.subr.mxu0 0.0
        %1631 = vmatpush1.msra.mxu0 0.0
        %1632 = vmatprep.subr.mxu0 0.0
        %1633 = vmatpush1.msra.mxu0 0.0
        %1634 = vmatprep.subr.mxu0 0.0
        %1635 = vmatpush1.msra.mxu0 0.0
        %1636 = vmatprep.subr.mxu0 0.0
        %1637 = vmatpush1.msra.mxu0 0.0
        %1638 = vmatprep.subr.mxu0 0.0
        %1639 = vmatpush1.msra.mxu0 0.0
        %1640 = vmatprep.subr.mxu0 0.0
        %1641 = vmatpush1.msra.mxu0 0.0
        %1642 = vmatprep.subr.mxu0 0.0
        %1643 = vmatpush1.msra.mxu0 0.0
        %1644 = vmatprep.subr.mxu0 0.0
        %1645 = vmatpush1.msra.mxu0 0.0
        %1646 = vmatprep.subr.mxu0 0.0
        %1647 = vmatpush1.msra.mxu0 0.0
        %1648 = vmatprep.subr.mxu0 0.0
        %1649 = vmatpush1.msra.mxu0 0.0
        %1650 = vmatprep.subr.mxu0 0.0
        %1651 = vmatpush1.msra.mxu0 0.0
        %1652 = vmatprep.subr.mxu0 0.0
        %1653 = vmatpush1.msra.mxu0 0.0
        %1654 = vmatprep.subr.mxu0 0.0
        %1655 = vmatpush1.msra.mxu0 0.0
        %1656 = vmatprep.subr.mxu0 0.0
        %1657 = vmatpush1.msra.mxu0 0.0
        %1658 = vmatprep.subr.mxu0 0.0
        %1659 = vmatpush1.msra.mxu0 0.0
        %1660 = vmatprep.subr.mxu0 0.0
        %1661 = vmatpush1.msra.mxu0 0.0
        %1662 = vmatprep.subr.mxu0 0.0
        %1663 = vmatpush1.msra.mxu0 0.0
        %1664 = vmatprep.subr.mxu0 0.0
        %1665 = vmatpush1.msra.mxu0 0.0
        %1666 = vmatprep.subr.mxu0 0.0
        %1667 = vmatpush1.msra.mxu0 0.0
        %1668 = vmatprep.subr.mxu0 0.0
        %1669 = vmatpush1.msra.mxu0 0.0
        %1670 = vmatprep.subr.mxu0 0.0
        %1671 = vmatpush1.msra.mxu0 0.0
        %1672 = vmatprep.subr.mxu0 0.0
        %1673 = vmatpush1.msra.mxu0 0.0
        %1674 = vmatprep.mubr.f32.mxu0 0.0
        %1675 = vmatmul.mubr.f32.gmra.mrb[0].mxu0 %v1608
        %v1676 = vpop.f32.mrb[0].mxu0
        %v1677 = vadd.f32 0.0, %v1676
        %v1678 = vpop.f32.mrb[0].mxu0
        %v1679 = vadd.f32 0.0, %v1678
        %1680 = vdwg.mxu0
        %v1681 = vld [vmem:[%s18] sm:$0xff]
        %v1682 = vld [vmem:[%s18 + $0x8] sm:$0xff]
        %v1683 = vld [vmem:[%s18 + $0x10] sm:$0xff]
        %v1684 = vld [vmem:[%s18 + $0x18] sm:$0xff]
        %v1686 = vsel %vm688, %v1602, 0
        %1688 = vmatprep.subr.mxu0 %v1682
        %1689 = vmatpush1.msra.mxu0 %v1681
        %1690 = vmatprep.subr.mxu0 %v1684
        %1691 = vmatpush1.msra.mxu0 %v1683
        %1692 = vmatprep.subr.mxu0 0.0
        %1693 = vmatpush1.msra.mxu0 0.0
        %1694 = vmatprep.subr.mxu0 0.0
        %1695 = vmatpush1.msra.mxu0 0.0
        %1696 = vmatprep.subr.mxu0 0.0
        %1697 = vmatpush1.msra.mxu0 0.0
        %1698 = vmatprep.subr.mxu0 0.0
        %1699 = vmatpush1.msra.mxu0 0.0
        %1700 = vmatprep.subr.mxu0 0.0
        %1701 = vmatpush1.msra.mxu0 0.0
        %1702 = vmatprep.subr.mxu0 0.0
        %1703 = vmatpush1.msra.mxu0 0.0
        %1704 = vmatprep.subr.mxu0 0.0
        %1705 = vmatpush1.msra.mxu0 0.0
        %1706 = vmatprep.subr.mxu0 0.0
        %1707 = vmatpush1.msra.mxu0 0.0
        %1708 = vmatprep.subr.mxu0 0.0
        %1709 = vmatpush1.msra.mxu0 0.0
        %1710 = vmatprep.subr.mxu0 0.0
        %1711 = vmatpush1.msra.mxu0 0.0
        %1712 = vmatprep.subr.mxu0 0.0
        %1713 = vmatpush1.msra.mxu0 0.0
        %1714 = vmatprep.subr.mxu0 0.0
        %1715 = vmatpush1.msra.mxu0 0.0
        %1716 = vmatprep.subr.mxu0 0.0
        %1717 = vmatpush1.msra.mxu0 0.0
        %1718 = vmatprep.subr.mxu0 0.0
        %1719 = vmatpush1.msra.mxu0 0.0
        %1720 = vmatprep.subr.mxu0 0.0
        %1721 = vmatpush1.msra.mxu0 0.0
        %1722 = vmatprep.subr.mxu0 0.0
        %1723 = vmatpush1.msra.mxu0 0.0
        %1724 = vmatprep.subr.mxu0 0.0
        %1725 = vmatpush1.msra.mxu0 0.0
        %1726 = vmatprep.subr.mxu0 0.0
        %1727 = vmatpush1.msra.mxu0 0.0
        %1728 = vmatprep.subr.mxu0 0.0
        %1729 = vmatpush1.msra.mxu0 0.0
        %1730 = vmatprep.subr.mxu0 0.0
        %1731 = vmatpush1.msra.mxu0 0.0
        %1732 = vmatprep.subr.mxu0 0.0
        %1733 = vmatpush1.msra.mxu0 0.0
        %1734 = vmatprep.subr.mxu0 0.0
        %1735 = vmatpush1.msra.mxu0 0.0
        %1736 = vmatprep.subr.mxu0 0.0
        %1737 = vmatpush1.msra.mxu0 0.0
        %1738 = vmatprep.subr.mxu0 0.0
        %1739 = vmatpush1.msra.mxu0 0.0
        %1740 = vmatprep.subr.mxu0 0.0
        %1741 = vmatpush1.msra.mxu0 0.0
        %1742 = vmatprep.subr.mxu0 0.0
        %1743 = vmatpush1.msra.mxu0 0.0
        %1744 = vmatprep.subr.mxu0 0.0
        %1745 = vmatpush1.msra.mxu0 0.0
        %1746 = vmatprep.subr.mxu0 0.0
        %1747 = vmatpush1.msra.mxu0 0.0
        %1748 = vmatprep.subr.mxu0 0.0
        %1749 = vmatpush1.msra.mxu0 0.0
        %1750 = vmatprep.subr.mxu0 0.0
        %1751 = vmatpush1.msra.mxu0 0.0
        %1752 = vmatprep.mubr.f32.mxu0 0.0
        %1753 = vmatmul.mubr.f32.gmra.mrb[0].mxu0 %v1686
        %v1754 = vpop.f32.mrb[0].mxu0
        %v1755 = vadd.f32 0.0, %v1754
        %v1756 = vpop.f32.mrb[0].mxu0
        %v1757 = vadd.f32 0.0, %v1756
        %1758 = vdwg.mxu0
        %v1759 = vmul.f32 %v1677, %v1755
        %v1760 = vmul.f32 %v1679, %v1757
        %v1761 = vmul.f32 %v1759, %v1028
        %v1762 = vmul.f32 %v1760, %v1029
        %v1763 = vadd.f32 %v1761, %v655
        %v1764 = vadd.f32 %v1762, %v656
        %v1765 = vmax.f32 %v1763, 0.0
        %v1766 = vmax.f32 %v1764, 0.0
        %1767 = vst [vmem:[%s649] sm:$0xff] %v1765
        %1768 = vst [vmem:[%s649 + $0x8] sm:$0xff] %v1766
        %s1769 = sand.u32 %s489, 1
        %s1770 = scalar_lea.sflag [#allocation3], %s1769
        %s1771 = sand.u32 %s489, 1
        %s1772 = smul.addr %s1771, 16
        %s1773 = scalar_lea.vmem [#allocation2], %s1772
        // Predicated region
        $region105: #{tpu_custom_call.1} parent=103 // pred_check
          %p1774 = pneg %p499
        $region106: #{tpu_custom_call.1} parent=103 // pred_check_branch
          %1776 = sbr.rel (%p1774) target = $region108
        $region107: #{tpu_custom_call.1} parent=103 // pred_region
          %s1778 = ssub.s32 256, 256
          %1779 = vsyncadd %s1770, %s1778
          %s1780 = smul.addr %s35, 2
          %s1781 = smul.addr %s1780, 128
          %s1782 = scalar_lea.hbm %s21, %s1781
          %s1784 = sshll.u32 %s1773, 4
          %s1785 = int_to_ptr.vmem [resolvable:$true] %s1784
          %1787 = dma.vmem_to_hbm [thread:$0]  %s1785, 256, %s1782, %s1770
        $region108: #{tpu_custom_call.1} parent=103 // pred_fallthru
          _
      $region104: #{tpu_custom_call.1} parent=5 // pred_fallthru
        _
      %p1788 = scmp.le.s32.totalorder 2, %s30
      // Predicated region
      $region109: #{tpu_custom_call.1} parent=5 // pred_check
        %p1789 = pneg %p1788
      $region110: #{tpu_custom_call.1} parent=5 // pred_check_branch
        %1791 = sbr.rel (%p1789) target = $region112
      $region111: #{tpu_custom_call.1} parent=5 // pred_region
        %s1792 = ssub.s32 %s30, 2
        // Predicated region
        $region113: #{tpu_custom_call.1} parent=111 // pred_check
          %p1793 = pneg %p505
        $region114: #{tpu_custom_call.1} parent=111 // pred_check_branch
          %1795 = sbr.rel (%p1793) target = $region116
        $region115: #{tpu_custom_call.1} parent=111 // pred_region
          %s1796 = sand.u32 %s490, 1
          %s1797 = scalar_lea.sflag [#allocation3], %s1796
          %s1798 = sand.u32 %s490, 1
          %s1799 = smul.addr %s1798, 16
          %s1800 = scalar_lea.vmem [#allocation2], %s1799
          %1801 = dma.done %s1797, 256
        $region116: #{tpu_custom_call.1} parent=111 // pred_fallthru
          _
      $region112: #{tpu_custom_call.1} parent=5 // pred_fallthru
        _
    $region6: #{tpu_custom_call.1} parent=1 // loop_footer
      %s34 = sadd.s32 1, %s30
    $region7: #{tpu_custom_call.1} parent=1 // loop_footer_branch
      %29 = sbr.rel target = $region3
    $region8: #{tpu_custom_call.1} parent=1 // loop_exit
      _
    %1802 = vsyncpa [#allocation3], 1
    %s1803 = scalar_lea.sflag [#allocation3], 1
    %1804 = vsyncpa %s1803, 1

</llo_original>
